<compile_context>
chip_gen: v7x
topology: tpu7x:2x2x1
jax: 0.10.0
libtpu: 0.0.40
codegen_flags: <defaults>
</compile_context>

<pallas_src>
import functools

import jax
import jax.numpy as jnp
import numpy as np
from jax.experimental import pallas as pl
from jax.experimental.pallas import tpu as pltpu


# -----------------------------------------------------------------------------
# Fused SPP kernel
# -----------------------------------------------------------------------------
def _spp_kernel(coords_ref, x_ref, w1_ref, b1_ref, w2_ref, b2_ref, o_ref, *, W):
    f32 = jnp.float32
    bf16 = jnp.bfloat16

    # ---- cv1: 1x1 conv (BN scale folded into bf16 weights) + bias + SiLU ----
    xT = x_ref[0]                                           # (C1, Mp) bf16
    x1 = jnp.dot(w1_ref[...], xT, preferred_element_type=f32)
    x1 = x1 + b1_ref[...]
    x1 = x1 * jax.nn.sigmoid(x1)                            # SiLU, (c_, Mp) f32

    # ---- channel-invariant neighbor masks, built once per image from the tiny
    #      (2, Mp) coordinate table (cost O(Mp), not O(c_*Mp)).  Additive 0/-inf
    #      form turns where+max into add+max and broadcasts over the channel
    #      sublanes.  Padded lanes have sentinel coords -> always rejected.
    coords = coords_ref[...]                                # (2, Mp) int32
    dh, dw = coords[0:1], coords[1:2]                       # dest row / col
    Mp = coords.shape[1]
    zero = f32(0.0)
    ninf = f32(-jnp.inf)

    def add_mask(shift, along_w):
        src = pltpu.roll(coords, shift, axis=1)
        sh, sw = src[0:1], src[1:2]
        if along_w:   # same row, column within +-2
            ok = (sh == dh) & (jnp.abs(sw - dw) <= 2)
        else:         # same column, row within +-2
            ok = (sw == dw) & (jnp.abs(sh - dh) <= 2)
        return jnp.where(ok, zero, ninf)                    # (1, Mp) f32

    w_terms = [(s % Mp, add_mask(s % Mp, True)) for s in (1, 2, -1, -2)]
    h_terms = [(s % Mp, add_mask(s % Mp, False)) for s in (W, 2 * W, -W, -2 * W)]

    def pool5(z):      # separable 5x5, stride 1, "same", -inf padding semantics
        r = z
        for s, a in w_terms:                                # pass 1: along W
            r = jnp.maximum(r, pltpu.roll(z, s, axis=1) + a)
        zc = r
        for s, a in h_terms:                                # pass 2: along H
            r = jnp.maximum(r, pltpu.roll(zc, s, axis=1) + a)
        return r

    # ---- cv2 as 4 accumulated partial matmuls (no (4*c_, Mp) concat copy).
    #      Each partial dot is issued as soon as its pyramid level exists so MXU
    #      work overlaps the XLU/VPU pool cascade of the next level.
    #      mp5 cascade identity: mp9 = mp5∘mp5, mp13 = mp5∘mp5∘mp5.
    def partial_dot(i, z):
        return jnp.dot(w2_ref[i], z.astype(bf16), preferred_element_type=f32)

    y = partial_dot(0, x1)
    p5 = pool5(x1)                                          # 5x5
    y += partial_dot(1, p5)
    p9 = pool5(p5)                                          # == 9x9
    y += partial_dot(2, p9)
    p13 = pool5(p9)                                         # == 13x13
    y += partial_dot(3, p13)

    y = y + b2_ref[...]
    y = y * jax.nn.sigmoid(y)
    o_ref[0] = y.astype(o_ref.dtype)


def spp_forward(x_nchw, p):
    """x_nchw: (N, C1, H, W) float32 (PyTorch layout). Returns (N, C2, H, W) f32."""
    N, C1, H, W = x_nchw.shape
    assert H >= 5 and W >= 5, "mask logic assumes spatial dims >= pool radius + 3"
    M = H * W
    Mp = ((M + 127) // 128) * 128                 # lane-dense flattened spatial axis
    c_ = p["w1k"].shape[0]
    C2 = p["w2k"].shape[1]

    x_flat = x_nchw.reshape(N, C1, M).astype(jnp.bfloat16)
    if Mp != M:
        x_flat = jnp.pad(x_flat, ((0, 0), (0, 0), (0, Mp - M)))

    # Per-pixel (row, col) table; padded lanes get a sentinel so every
    # neighbor-validity check rejects them (emulates -inf MaxPool padding and
    # keeps lane padding out of border maxima).  Resident across grid steps.
    pos = jnp.arange(Mp, dtype=jnp.int32)
    valid = pos < M
    coords = jnp.stack([jnp.where(valid, pos // W, -(10 ** 6)),
                        jnp.where(valid, pos % W, -(10 ** 6))], axis=0)   # (2, Mp)

    out = pl.pallas_call(
        functools.partial(_spp_kernel, W=W),
        out_shape=jax.ShapeDtypeStruct((N, C2, Mp), jnp.float32),
        grid=(N,),
        in_specs=[
            pl.BlockSpec((2, Mp), lambda n: (0, 0)),          # coords (resident)
            pl.BlockSpec((1, C1, Mp), lambda n: (n, 0, 0)),   # activations (bf16)
            pl.BlockSpec((c_, C1), lambda n: (0, 0)),         # cv1 weight (BN-folded bf16)
            pl.BlockSpec((c_, 1), lambda n: (0, 0)),          # cv1 bias (f32)
            pl.BlockSpec((4, C2, c_), lambda n: (0, 0, 0)),   # cv2 weight, per level
            pl.BlockSpec((C2, 1), lambda n: (0, 0)),          # cv2 bias (f32)
        ],
        out_specs=pl.BlockSpec((1, C2, Mp), lambda n: (n, 0, 0)),
        compiler_params=pltpu.CompilerParams(dimension_semantics=("parallel",)),
    )(coords, x_flat, p["w1k"], p["b1k"], p["w2k"], p["b2k"])
    return out[:, :, :M].reshape(N, C2, H, W)


# -----------------------------------------------------------------------------
# Pure-JAX reference (direct 5/9/13 pools, un-folded BN, f32) for correctness
# -----------------------------------------------------------------------------
def reference(x, p):
    def conv_bn_silu(z, w, s, b):                     # 1x1 conv + BN(eval) + SiLU
        y = jnp.einsum("oc,nchw->nohw", w, z)
        y = y * s[None, :, None, None] + b[None, :, None, None]
        return jax.nn.silu(y)

    def maxpool(z, k):
        pad = k // 2
        return jax.lax.reduce_window(
            z, -jnp.inf, jax.lax.max,
            window_dimensions=(1, 1, k, k), window_strides=(1, 1, 1, 1),
            padding=((0, 0), (0, 0), (pad, pad), (pad, pad)))

    x1 = conv_bn_silu(x, p["w1_raw"], p["s1"], p["bn_b1"])
    cat = jnp.concatenate([x1] + [maxpool(x1, k) for k in (5, 9, 13)], axis=1)
    return conv_bn_silu(cat, p["w2_raw"], p["s2"], p["bn_b2"])


# -----------------------------------------------------------------------------
# Deterministic parameters (shapes per SPP.__init__; BN folded for the kernel)
# -----------------------------------------------------------------------------
def _folded_bn(c, tag, eps=1e-5):
    r = jnp.arange(c, dtype=jnp.float32)
    gamma = 1.0 + 0.05 * tag + 0.01 * r
    beta = 0.02 * tag - 0.01 * r
    mean = 0.03 * r - 0.1
    var = 1.0 + 0.1 * r
    scale = gamma / jnp.sqrt(var + eps)
    bias = beta - mean * scale
    return scale, bias


def make_params(key, c1, c2, n_pools=3):
    c_ = c1 // 2
    k1, k2 = jax.random.split(key)
    w1 = 0.2 * jax.random.normal(k1, (c_, c1), jnp.float32)                  # cv1 1x1
    w2 = 0.2 * jax.random.normal(k2, (c2, c_ * (n_pools + 1)), jnp.float32)  # cv2 1x1
    s1, b1 = _folded_bn(c_, 1)
    s2, b2 = _folded_bn(c2, 2)
    p = dict(w1_raw=w1, w2_raw=w2, s1=s1, bn_b1=b1, s2=s2, bn_b2=b2)
    # Kernel-side params: BN scale folded into bf16 MXU weights, bias kept f32
    # (C, 1).  cv2 weight reshaped to (levels, C2, c_) so the kernel takes
    # per-pyramid-level slices by leading index (no concat, no lane slicing).
    p["w1k"] = (w1 * s1[:, None]).astype(jnp.bfloat16)
    p["b1k"] = b1[:, None]
    p["w2k"] = jnp.transpose(
        (w2 * s2[:, None]).reshape(c2, n_pools + 1, c_), (1, 0, 2)
    ).astype(jnp.bfloat16)
    p["b2k"] = b2[:, None]
    return p


if __name__ == "__main__":
    key = jax.random.PRNGKey(0)
    # Case 1: lane-aligned spatial (M = 256).  Case 2: non-multiple-of-128
    # spatial (13x13 -> M = 169, padded to 256) exercising the pad-mask path.
    cases = [
        dict(N=2, C1=16, C2=16, H=16, W=16),
        dict(N=1, C1=16, C2=24, H=13, W=13),
    ]
    for c in cases:
        kx, kp, key = jax.random.split(key, 3)
        x_nchw = jax.random.normal(kx, (c["N"], c["C1"], c["H"], c["W"]), jnp.float32)
        params = make_params(kp, c["C1"], c["C2"])

        out = spp_forward(x_nchw, params)
        jax.block_until_ready(out)

        ref = reference(x_nchw, params)
        # Pooling is exact; matmuls use bf16 MXU operands (folded bf16 weights +
        # cast activations) vs the f32 reference -> modest tolerance.
        np.testing.assert_allclose(np.asarray(out), np.asarray(ref),
                                   rtol=2e-2, atol=4e-2)
        assert out.shape == (c["N"], c["C2"], c["H"], c["W"])
    print("KERNEL_OK")
</pallas_src>

<mosaic_0001>
module attributes {stable_mosaic.version = 11 : i64} {
  func.func @_spp_kernel(%arg0: i32, %arg1: memref<2x256xi32, #tpu.memory_space<vmem>>, %arg2: memref<1x16x256xbf16, #tpu.memory_space<vmem>>, %arg3: memref<8x16xbf16, #tpu.memory_space<vmem>>, %arg4: memref<8x1xf32, #tpu.memory_space<vmem>>, %arg5: memref<4x16x8xbf16, #tpu.memory_space<vmem>>, %arg6: memref<16x1xf32, #tpu.memory_space<vmem>>, %arg7: memref<1x16x256xf32, #tpu.memory_space<vmem>>) attributes {dimension_semantics = [#tpu.dimension_semantics<parallel>], iteration_bounds = array<i64: 2>, scalar_prefetch = 0 : i64, scratch_operands = 0 : i64, tpu.core_type = #tpu.core_type<tc>, window_params = [{pipeline_mode = #tpu.pipeline_mode<synchronous>, transform_indices = @transform_0, window_bounds = array<i64: 2, 256>}, {transform_indices = @transform_1, window_bounds = array<i64: 1, 16, 256>}, {pipeline_mode = #tpu.pipeline_mode<synchronous>, transform_indices = @transform_2, window_bounds = array<i64: 8, 16>}, {pipeline_mode = #tpu.pipeline_mode<synchronous>, transform_indices = @transform_3, window_bounds = array<i64: 8, 1>}, {pipeline_mode = #tpu.pipeline_mode<synchronous>, transform_indices = @transform_4, window_bounds = array<i64: 4, 16, 8>}, {pipeline_mode = #tpu.pipeline_mode<synchronous>, transform_indices = @transform_5, window_bounds = array<i64: 16, 1>}, {transform_indices = @transform_6, window_bounds = array<i64: 1, 16, 256>}]} {
    %c0 = arith.constant 0 : index
    %c0_0 = arith.constant 0 : index
    %c0_1 = arith.constant 0 : index
    %0 = vector.load %arg2[%c0, %c0_0, %c0_1] : memref<1x16x256xbf16, #tpu.memory_space<vmem>>, vector<1x16x256xbf16>
    %1 = vector.shape_cast %0 : vector<1x16x256xbf16> to vector<16x256xbf16>
    %c0_2 = arith.constant 0 : index
    %c0_3 = arith.constant 0 : index
    %2 = vector.load %arg3[%c0_2, %c0_3] : memref<8x16xbf16, #tpu.memory_space<vmem>>, vector<8x16xbf16>
    %cst = arith.constant dense<0.000000e+00> : vector<8x256xf32>
    %3 = tpu.matmul %2, %1, %cst {dimension_numbers = #tpu.dot_dimension_numbers<[1], [0], [0], [1], [0, 0, 1, 1], [], []>} : vector<8x16xbf16>, vector<16x256xbf16>, vector<8x256xf32> -> vector<8x256xf32>
    %c0_4 = arith.constant 0 : index
    %c0_5 = arith.constant 0 : index
    %4 = vector.load %arg4[%c0_4, %c0_5] : memref<8x1xf32, #tpu.memory_space<vmem>>, vector<8x1xf32>
    %5 = vector.broadcast %4 : vector<8x1xf32> to vector<8x256xf32>
    %6 = arith.addf %3, %5 : vector<8x256xf32>
    %7 = arith.negf %6 : vector<8x256xf32>
    %8 = math.exp %7 : vector<8x256xf32>
    %cst_6 = arith.constant 1.000000e+00 : f32
    %9 = vector.broadcast %cst_6 : f32 to vector<8x256xf32>
    %10 = arith.addf %9, %8 : vector<8x256xf32>
    %11 = arith.divf %9, %10 : vector<8x256xf32>
    %12 = arith.mulf %6, %11 : vector<8x256xf32>
    %c0_7 = arith.constant 0 : index
    %c0_8 = arith.constant 0 : index
    %13 = vector.load %arg1[%c0_7, %c0_8] : memref<2x256xi32, #tpu.memory_space<vmem>>, vector<2x256xi32>
    %14 = vector.extract_strided_slice %13 {offsets = [0, 0], sizes = [1, 256], strides = [1, 1]} : vector<2x256xi32> to vector<1x256xi32>
    %15 = vector.extract_strided_slice %13 {offsets = [1, 0], sizes = [1, 256], strides = [1, 1]} : vector<2x256xi32> to vector<1x256xi32>
    %c1_i32 = arith.constant 1 : i32
    %16 = tpu.dynamic_rotate %13 by %c1_i32 dim 1 : vector<2x256xi32>, i32 -> vector<2x256xi32>
    %17 = vector.extract_strided_slice %16 {offsets = [0, 0], sizes = [1, 256], strides = [1, 1]} : vector<2x256xi32> to vector<1x256xi32>
    %18 = vector.extract_strided_slice %16 {offsets = [1, 0], sizes = [1, 256], strides = [1, 1]} : vector<2x256xi32> to vector<1x256xi32>
    %19 = arith.cmpi eq, %17, %14 : vector<1x256xi32>
    %20 = arith.subi %18, %15 : vector<1x256xi32>
    %21 = math.absi %20 : vector<1x256xi32>
    %c2_i32 = arith.constant 2 : i32
    %22 = vector.broadcast %c2_i32 : i32 to vector<1x256xi32>
    %23 = arith.cmpi sle, %21, %22 : vector<1x256xi32>
    %24 = arith.andi %19, %23 : vector<1x256xi1>
    %cst_9 = arith.constant 0.000000e+00 : f32
    %cst_10 = arith.constant 0xFF800000 : f32
    %25 = vector.broadcast %cst_9 : f32 to vector<1x256xf32>
    %26 = vector.broadcast %cst_10 : f32 to vector<1x256xf32>
    %27 = arith.select %24, %25, %26 : vector<1x256xi1>, vector<1x256xf32>
    %c2_i32_11 = arith.constant 2 : i32
    %28 = tpu.dynamic_rotate %13 by %c2_i32_11 dim 1 : vector<2x256xi32>, i32 -> vector<2x256xi32>
    %29 = vector.extract_strided_slice %28 {offsets = [0, 0], sizes = [1, 256], strides = [1, 1]} : vector<2x256xi32> to vector<1x256xi32>
    %30 = vector.extract_strided_slice %28 {offsets = [1, 0], sizes = [1, 256], strides = [1, 1]} : vector<2x256xi32> to vector<1x256xi32>
    %31 = arith.cmpi eq, %29, %14 : vector<1x256xi32>
    %32 = arith.subi %30, %15 : vector<1x256xi32>
    %33 = math.absi %32 : vector<1x256xi32>
    %c2_i32_12 = arith.constant 2 : i32
    %34 = vector.broadcast %c2_i32_12 : i32 to vector<1x256xi32>
    %35 = arith.cmpi sle, %33, %34 : vector<1x256xi32>
    %36 = arith.andi %31, %35 : vector<1x256xi1>
    %cst_13 = arith.constant 0.000000e+00 : f32
    %cst_14 = arith.constant 0xFF800000 : f32
    %37 = vector.broadcast %cst_13 : f32 to vector<1x256xf32>
    %38 = vector.broadcast %cst_14 : f32 to vector<1x256xf32>
    %39 = arith.select %36, %37, %38 : vector<1x256xi1>, vector<1x256xf32>
    %c255_i32 = arith.constant 255 : i32
    %40 = tpu.dynamic_rotate %13 by %c255_i32 dim 1 : vector<2x256xi32>, i32 -> vector<2x256xi32>
    %41 = vector.extract_strided_slice %40 {offsets = [0, 0], sizes = [1, 256], strides = [1, 1]} : vector<2x256xi32> to vector<1x256xi32>
    %42 = vector.extract_strided_slice %40 {offsets = [1, 0], sizes = [1, 256], strides = [1, 1]} : vector<2x256xi32> to vector<1x256xi32>
    %43 = arith.cmpi eq, %41, %14 : vector<1x256xi32>
    %44 = arith.subi %42, %15 : vector<1x256xi32>
    %45 = math.absi %44 : vector<1x256xi32>
    %c2_i32_15 = arith.constant 2 : i32
    %46 = vector.broadcast %c2_i32_15 : i32 to vector<1x256xi32>
    %47 = arith.cmpi sle, %45, %46 : vector<1x256xi32>
    %48 = arith.andi %43, %47 : vector<1x256xi1>
    %cst_16 = arith.constant 0.000000e+00 : f32
    %cst_17 = arith.constant 0xFF800000 : f32
    %49 = vector.broadcast %cst_16 : f32 to vector<1x256xf32>
    %50 = vector.broadcast %cst_17 : f32 to vector<1x256xf32>
    %51 = arith.select %48, %49, %50 : vector<1x256xi1>, vector<1x256xf32>
    %c254_i32 = arith.constant 254 : i32
    %52 = tpu.dynamic_rotate %13 by %c254_i32 dim 1 : vector<2x256xi32>, i32 -> vector<2x256xi32>
    %53 = vector.extract_strided_slice %52 {offsets = [0, 0], sizes = [1, 256], strides = [1, 1]} : vector<2x256xi32> to vector<1x256xi32>
    %54 = vector.extract_strided_slice %52 {offsets = [1, 0], sizes = [1, 256], strides = [1, 1]} : vector<2x256xi32> to vector<1x256xi32>
    %55 = arith.cmpi eq, %53, %14 : vector<1x256xi32>
    %56 = arith.subi %54, %15 : vector<1x256xi32>
    %57 = math.absi %56 : vector<1x256xi32>
    %c2_i32_18 = arith.constant 2 : i32
    %58 = vector.broadcast %c2_i32_18 : i32 to vector<1x256xi32>
    %59 = arith.cmpi sle, %57, %58 : vector<1x256xi32>
    %60 = arith.andi %55, %59 : vector<1x256xi1>
    %cst_19 = arith.constant 0.000000e+00 : f32
    %cst_20 = arith.constant 0xFF800000 : f32
    %61 = vector.broadcast %cst_19 : f32 to vector<1x256xf32>
    %62 = vector.broadcast %cst_20 : f32 to vector<1x256xf32>
    %63 = arith.select %60, %61, %62 : vector<1x256xi1>, vector<1x256xf32>
    %c16_i32 = arith.constant 16 : i32
    %64 = tpu.dynamic_rotate %13 by %c16_i32 dim 1 : vector<2x256xi32>, i32 -> vector<2x256xi32>
    %65 = vector.extract_strided_slice %64 {offsets = [0, 0], sizes = [1, 256], strides = [1, 1]} : vector<2x256xi32> to vector<1x256xi32>
    %66 = vector.extract_strided_slice %64 {offsets = [1, 0], sizes = [1, 256], strides = [1, 1]} : vector<2x256xi32> to vector<1x256xi32>
    %67 = arith.cmpi eq, %66, %15 : vector<1x256xi32>
    %68 = arith.subi %65, %14 : vector<1x256xi32>
    %69 = math.absi %68 : vector<1x256xi32>
    %c2_i32_21 = arith.constant 2 : i32
    %70 = vector.broadcast %c2_i32_21 : i32 to vector<1x256xi32>
    %71 = arith.cmpi sle, %69, %70 : vector<1x256xi32>
    %72 = arith.andi %67, %71 : vector<1x256xi1>
    %cst_22 = arith.constant 0.000000e+00 : f32
    %cst_23 = arith.constant 0xFF800000 : f32
    %73 = vector.broadcast %cst_22 : f32 to vector<1x256xf32>
    %74 = vector.broadcast %cst_23 : f32 to vector<1x256xf32>
    %75 = arith.select %72, %73, %74 : vector<1x256xi1>, vector<1x256xf32>
    %c32_i32 = arith.constant 32 : i32
    %76 = tpu.dynamic_rotate %13 by %c32_i32 dim 1 : vector<2x256xi32>, i32 -> vector<2x256xi32>
    %77 = vector.extract_strided_slice %76 {offsets = [0, 0], sizes = [1, 256], strides = [1, 1]} : vector<2x256xi32> to vector<1x256xi32>
    %78 = vector.extract_strided_slice %76 {offsets = [1, 0], sizes = [1, 256], strides = [1, 1]} : vector<2x256xi32> to vector<1x256xi32>
    %79 = arith.cmpi eq, %78, %15 : vector<1x256xi32>
    %80 = arith.subi %77, %14 : vector<1x256xi32>
    %81 = math.absi %80 : vector<1x256xi32>
    %c2_i32_24 = arith.constant 2 : i32
    %82 = vector.broadcast %c2_i32_24 : i32 to vector<1x256xi32>
    %83 = arith.cmpi sle, %81, %82 : vector<1x256xi32>
    %84 = arith.andi %79, %83 : vector<1x256xi1>
    %cst_25 = arith.constant 0.000000e+00 : f32
    %cst_26 = arith.constant 0xFF800000 : f32
    %85 = vector.broadcast %cst_25 : f32 to vector<1x256xf32>
    %86 = vector.broadcast %cst_26 : f32 to vector<1x256xf32>
    %87 = arith.select %84, %85, %86 : vector<1x256xi1>, vector<1x256xf32>
    %c240_i32 = arith.constant 240 : i32
    %88 = tpu.dynamic_rotate %13 by %c240_i32 dim 1 : vector<2x256xi32>, i32 -> vector<2x256xi32>
    %89 = vector.extract_strided_slice %88 {offsets = [0, 0], sizes = [1, 256], strides = [1, 1]} : vector<2x256xi32> to vector<1x256xi32>
    %90 = vector.extract_strided_slice %88 {offsets = [1, 0], sizes = [1, 256], strides = [1, 1]} : vector<2x256xi32> to vector<1x256xi32>
    %91 = arith.cmpi eq, %90, %15 : vector<1x256xi32>
    %92 = arith.subi %89, %14 : vector<1x256xi32>
    %93 = math.absi %92 : vector<1x256xi32>
    %c2_i32_27 = arith.constant 2 : i32
    %94 = vector.broadcast %c2_i32_27 : i32 to vector<1x256xi32>
    %95 = arith.cmpi sle, %93, %94 : vector<1x256xi32>
    %96 = arith.andi %91, %95 : vector<1x256xi1>
    %cst_28 = arith.constant 0.000000e+00 : f32
    %cst_29 = arith.constant 0xFF800000 : f32
    %97 = vector.broadcast %cst_28 : f32 to vector<1x256xf32>
    %98 = vector.broadcast %cst_29 : f32 to vector<1x256xf32>
    %99 = arith.select %96, %97, %98 : vector<1x256xi1>, vector<1x256xf32>
    %c224_i32 = arith.constant 224 : i32
    %100 = tpu.dynamic_rotate %13 by %c224_i32 dim 1 : vector<2x256xi32>, i32 -> vector<2x256xi32>
    %101 = vector.extract_strided_slice %100 {offsets = [0, 0], sizes = [1, 256], strides = [1, 1]} : vector<2x256xi32> to vector<1x256xi32>
    %102 = vector.extract_strided_slice %100 {offsets = [1, 0], sizes = [1, 256], strides = [1, 1]} : vector<2x256xi32> to vector<1x256xi32>
    %103 = arith.cmpi eq, %102, %15 : vector<1x256xi32>
    %104 = arith.subi %101, %14 : vector<1x256xi32>
    %105 = math.absi %104 : vector<1x256xi32>
    %c2_i32_30 = arith.constant 2 : i32
    %106 = vector.broadcast %c2_i32_30 : i32 to vector<1x256xi32>
    %107 = arith.cmpi sle, %105, %106 : vector<1x256xi32>
    %108 = arith.andi %103, %107 : vector<1x256xi1>
    %cst_31 = arith.constant 0.000000e+00 : f32
    %cst_32 = arith.constant 0xFF800000 : f32
    %109 = vector.broadcast %cst_31 : f32 to vector<1x256xf32>
    %110 = vector.broadcast %cst_32 : f32 to vector<1x256xf32>
    %111 = arith.select %108, %109, %110 : vector<1x256xi1>, vector<1x256xf32>
    %c0_33 = arith.constant 0 : index
    %c0_34 = arith.constant 0 : index
    %c0_35 = arith.constant 0 : index
    %112 = vector.load %arg5[%c0_33, %c0_34, %c0_35] : memref<4x16x8xbf16, #tpu.memory_space<vmem>>, vector<1x16x8xbf16>
    %113 = vector.shape_cast %112 : vector<1x16x8xbf16> to vector<16x8xbf16>
    %114 = arith.truncf %12 : vector<8x256xf32> to vector<8x256xbf16>
    %cst_36 = arith.constant dense<0.000000e+00> : vector<16x256xf32>
    %115 = tpu.matmul %113, %114, %cst_36 {dimension_numbers = #tpu.dot_dimension_numbers<[1], [0], [0], [1], [0, 0, 1, 1], [], []>} : vector<16x8xbf16>, vector<8x256xbf16>, vector<16x256xf32> -> vector<16x256xf32>
    %c1_i32_37 = arith.constant 1 : i32
    %116 = tpu.dynamic_rotate %12 by %c1_i32_37 dim 1 : vector<8x256xf32>, i32 -> vector<8x256xf32>
    %117 = vector.broadcast %27 : vector<1x256xf32> to vector<8x256xf32>
    %118 = arith.addf %116, %117 : vector<8x256xf32>
    %119 = arith.maximumf %12, %118 : vector<8x256xf32>
    %c2_i32_38 = arith.constant 2 : i32
    %120 = tpu.dynamic_rotate %12 by %c2_i32_38 dim 1 : vector<8x256xf32>, i32 -> vector<8x256xf32>
    %121 = vector.broadcast %39 : vector<1x256xf32> to vector<8x256xf32>
    %122 = arith.addf %120, %121 : vector<8x256xf32>
    %123 = arith.maximumf %119, %122 : vector<8x256xf32>
    %c255_i32_39 = arith.constant 255 : i32
    %124 = tpu.dynamic_rotate %12 by %c255_i32_39 dim 1 : vector<8x256xf32>, i32 -> vector<8x256xf32>
    %125 = vector.broadcast %51 : vector<1x256xf32> to vector<8x256xf32>
    %126 = arith.addf %124, %125 : vector<8x256xf32>
    %127 = arith.maximumf %123, %126 : vector<8x256xf32>
    %c254_i32_40 = arith.constant 254 : i32
    %128 = tpu.dynamic_rotate %12 by %c254_i32_40 dim 1 : vector<8x256xf32>, i32 -> vector<8x256xf32>
    %129 = vector.broadcast %63 : vector<1x256xf32> to vector<8x256xf32>
    %130 = arith.addf %128, %129 : vector<8x256xf32>
    %131 = arith.maximumf %127, %130 : vector<8x256xf32>
    %c16_i32_41 = arith.constant 16 : i32
    %132 = tpu.dynamic_rotate %131 by %c16_i32_41 dim 1 : vector<8x256xf32>, i32 -> vector<8x256xf32>
    %133 = vector.broadcast %75 : vector<1x256xf32> to vector<8x256xf32>
    %134 = arith.addf %132, %133 : vector<8x256xf32>
    %135 = arith.maximumf %131, %134 : vector<8x256xf32>
    %c32_i32_42 = arith.constant 32 : i32
    %136 = tpu.dynamic_rotate %131 by %c32_i32_42 dim 1 : vector<8x256xf32>, i32 -> vector<8x256xf32>
    %137 = vector.broadcast %87 : vector<1x256xf32> to vector<8x256xf32>
    %138 = arith.addf %136, %137 : vector<8x256xf32>
    %139 = arith.maximumf %135, %138 : vector<8x256xf32>
    %c240_i32_43 = arith.constant 240 : i32
    %140 = tpu.dynamic_rotate %131 by %c240_i32_43 dim 1 : vector<8x256xf32>, i32 -> vector<8x256xf32>
    %141 = vector.broadcast %99 : vector<1x256xf32> to vector<8x256xf32>
    %142 = arith.addf %140, %141 : vector<8x256xf32>
    %143 = arith.maximumf %139, %142 : vector<8x256xf32>
    %c224_i32_44 = arith.constant 224 : i32
    %144 = tpu.dynamic_rotate %131 by %c224_i32_44 dim 1 : vector<8x256xf32>, i32 -> vector<8x256xf32>
    %145 = vector.broadcast %111 : vector<1x256xf32> to vector<8x256xf32>
    %146 = arith.addf %144, %145 : vector<8x256xf32>
    %147 = arith.maximumf %143, %146 : vector<8x256xf32>
    %c1 = arith.constant 1 : index
    %c0_45 = arith.constant 0 : index
    %c0_46 = arith.constant 0 : index
    %148 = vector.load %arg5[%c1, %c0_45, %c0_46] : memref<4x16x8xbf16, #tpu.memory_space<vmem>>, vector<1x16x8xbf16>
    %149 = vector.shape_cast %148 : vector<1x16x8xbf16> to vector<16x8xbf16>
    %150 = arith.truncf %147 : vector<8x256xf32> to vector<8x256xbf16>
    %cst_47 = arith.constant dense<0.000000e+00> : vector<16x256xf32>
    %151 = tpu.matmul %149, %150, %cst_47 {dimension_numbers = #tpu.dot_dimension_numbers<[1], [0], [0], [1], [0, 0, 1, 1], [], []>} : vector<16x8xbf16>, vector<8x256xbf16>, vector<16x256xf32> -> vector<16x256xf32>
    %152 = arith.addf %115, %151 : vector<16x256xf32>
    %c1_i32_48 = arith.constant 1 : i32
    %153 = tpu.dynamic_rotate %147 by %c1_i32_48 dim 1 : vector<8x256xf32>, i32 -> vector<8x256xf32>
    %154 = vector.broadcast %27 : vector<1x256xf32> to vector<8x256xf32>
    %155 = arith.addf %153, %154 : vector<8x256xf32>
    %156 = arith.maximumf %147, %155 : vector<8x256xf32>
    %c2_i32_49 = arith.constant 2 : i32
    %157 = tpu.dynamic_rotate %147 by %c2_i32_49 dim 1 : vector<8x256xf32>, i32 -> vector<8x256xf32>
    %158 = vector.broadcast %39 : vector<1x256xf32> to vector<8x256xf32>
    %159 = arith.addf %157, %158 : vector<8x256xf32>
    %160 = arith.maximumf %156, %159 : vector<8x256xf32>
    %c255_i32_50 = arith.constant 255 : i32
    %161 = tpu.dynamic_rotate %147 by %c255_i32_50 dim 1 : vector<8x256xf32>, i32 -> vector<8x256xf32>
    %162 = vector.broadcast %51 : vector<1x256xf32> to vector<8x256xf32>
    %163 = arith.addf %161, %162 : vector<8x256xf32>
    %164 = arith.maximumf %160, %163 : vector<8x256xf32>
    %c254_i32_51 = arith.constant 254 : i32
    %165 = tpu.dynamic_rotate %147 by %c254_i32_51 dim 1 : vector<8x256xf32>, i32 -> vector<8x256xf32>
    %166 = vector.broadcast %63 : vector<1x256xf32> to vector<8x256xf32>
    %167 = arith.addf %165, %166 : vector<8x256xf32>
    %168 = arith.maximumf %164, %167 : vector<8x256xf32>
    %c16_i32_52 = arith.constant 16 : i32
    %169 = tpu.dynamic_rotate %168 by %c16_i32_52 dim 1 : vector<8x256xf32>, i32 -> vector<8x256xf32>
    %170 = vector.broadcast %75 : vector<1x256xf32> to vector<8x256xf32>
    %171 = arith.addf %169, %170 : vector<8x256xf32>
    %172 = arith.maximumf %168, %171 : vector<8x256xf32>
    %c32_i32_53 = arith.constant 32 : i32
    %173 = tpu.dynamic_rotate %168 by %c32_i32_53 dim 1 : vector<8x256xf32>, i32 -> vector<8x256xf32>
    %174 = vector.broadcast %87 : vector<1x256xf32> to vector<8x256xf32>
    %175 = arith.addf %173, %174 : vector<8x256xf32>
    %176 = arith.maximumf %172, %175 : vector<8x256xf32>
    %c240_i32_54 = arith.constant 240 : i32
    %177 = tpu.dynamic_rotate %168 by %c240_i32_54 dim 1 : vector<8x256xf32>, i32 -> vector<8x256xf32>
    %178 = vector.broadcast %99 : vector<1x256xf32> to vector<8x256xf32>
    %179 = arith.addf %177, %178 : vector<8x256xf32>
    %180 = arith.maximumf %176, %179 : vector<8x256xf32>
    %c224_i32_55 = arith.constant 224 : i32
    %181 = tpu.dynamic_rotate %168 by %c224_i32_55 dim 1 : vector<8x256xf32>, i32 -> vector<8x256xf32>
    %182 = vector.broadcast %111 : vector<1x256xf32> to vector<8x256xf32>
    %183 = arith.addf %181, %182 : vector<8x256xf32>
    %184 = arith.maximumf %180, %183 : vector<8x256xf32>
    %c2 = arith.constant 2 : index
    %c0_56 = arith.constant 0 : index
    %c0_57 = arith.constant 0 : index
    %185 = vector.load %arg5[%c2, %c0_56, %c0_57] : memref<4x16x8xbf16, #tpu.memory_space<vmem>>, vector<1x16x8xbf16>
    %186 = vector.shape_cast %185 : vector<1x16x8xbf16> to vector<16x8xbf16>
    %187 = arith.truncf %184 : vector<8x256xf32> to vector<8x256xbf16>
    %cst_58 = arith.constant dense<0.000000e+00> : vector<16x256xf32>
    %188 = tpu.matmul %186, %187, %cst_58 {dimension_numbers = #tpu.dot_dimension_numbers<[1], [0], [0], [1], [0, 0, 1, 1], [], []>} : vector<16x8xbf16>, vector<8x256xbf16>, vector<16x256xf32> -> vector<16x256xf32>
    %189 = arith.addf %152, %188 : vector<16x256xf32>
    %c1_i32_59 = arith.constant 1 : i32
    %190 = tpu.dynamic_rotate %184 by %c1_i32_59 dim 1 : vector<8x256xf32>, i32 -> vector<8x256xf32>
    %191 = vector.broadcast %27 : vector<1x256xf32> to vector<8x256xf32>
    %192 = arith.addf %190, %191 : vector<8x256xf32>
    %193 = arith.maximumf %184, %192 : vector<8x256xf32>
    %c2_i32_60 = arith.constant 2 : i32
    %194 = tpu.dynamic_rotate %184 by %c2_i32_60 dim 1 : vector<8x256xf32>, i32 -> vector<8x256xf32>
    %195 = vector.broadcast %39 : vector<1x256xf32> to vector<8x256xf32>
    %196 = arith.addf %194, %195 : vector<8x256xf32>
    %197 = arith.maximumf %193, %196 : vector<8x256xf32>
    %c255_i32_61 = arith.constant 255 : i32
    %198 = tpu.dynamic_rotate %184 by %c255_i32_61 dim 1 : vector<8x256xf32>, i32 -> vector<8x256xf32>
    %199 = vector.broadcast %51 : vector<1x256xf32> to vector<8x256xf32>
    %200 = arith.addf %198, %199 : vector<8x256xf32>
    %201 = arith.maximumf %197, %200 : vector<8x256xf32>
    %c254_i32_62 = arith.constant 254 : i32
    %202 = tpu.dynamic_rotate %184 by %c254_i32_62 dim 1 : vector<8x256xf32>, i32 -> vector<8x256xf32>
    %203 = vector.broadcast %63 : vector<1x256xf32> to vector<8x256xf32>
    %204 = arith.addf %202, %203 : vector<8x256xf32>
    %205 = arith.maximumf %201, %204 : vector<8x256xf32>
    %c16_i32_63 = arith.constant 16 : i32
    %206 = tpu.dynamic_rotate %205 by %c16_i32_63 dim 1 : vector<8x256xf32>, i32 -> vector<8x256xf32>
    %207 = vector.broadcast %75 : vector<1x256xf32> to vector<8x256xf32>
    %208 = arith.addf %206, %207 : vector<8x256xf32>
    %209 = arith.maximumf %205, %208 : vector<8x256xf32>
    %c32_i32_64 = arith.constant 32 : i32
    %210 = tpu.dynamic_rotate %205 by %c32_i32_64 dim 1 : vector<8x256xf32>, i32 -> vector<8x256xf32>
    %211 = vector.broadcast %87 : vector<1x256xf32> to vector<8x256xf32>
    %212 = arith.addf %210, %211 : vector<8x256xf32>
    %213 = arith.maximumf %209, %212 : vector<8x256xf32>
    %c240_i32_65 = arith.constant 240 : i32
    %214 = tpu.dynamic_rotate %205 by %c240_i32_65 dim 1 : vector<8x256xf32>, i32 -> vector<8x256xf32>
    %215 = vector.broadcast %99 : vector<1x256xf32> to vector<8x256xf32>
    %216 = arith.addf %214, %215 : vector<8x256xf32>
    %217 = arith.maximumf %213, %216 : vector<8x256xf32>
    %c224_i32_66 = arith.constant 224 : i32
    %218 = tpu.dynamic_rotate %205 by %c224_i32_66 dim 1 : vector<8x256xf32>, i32 -> vector<8x256xf32>
    %219 = vector.broadcast %111 : vector<1x256xf32> to vector<8x256xf32>
    %220 = arith.addf %218, %219 : vector<8x256xf32>
    %221 = arith.maximumf %217, %220 : vector<8x256xf32>
    %c3 = arith.constant 3 : index
    %c0_67 = arith.constant 0 : index
    %c0_68 = arith.constant 0 : index
    %222 = vector.load %arg5[%c3, %c0_67, %c0_68] : memref<4x16x8xbf16, #tpu.memory_space<vmem>>, vector<1x16x8xbf16>
    %223 = vector.shape_cast %222 : vector<1x16x8xbf16> to vector<16x8xbf16>
    %224 = arith.truncf %221 : vector<8x256xf32> to vector<8x256xbf16>
    %cst_69 = arith.constant dense<0.000000e+00> : vector<16x256xf32>
    %225 = tpu.matmul %223, %224, %cst_69 {dimension_numbers = #tpu.dot_dimension_numbers<[1], [0], [0], [1], [0, 0, 1, 1], [], []>} : vector<16x8xbf16>, vector<8x256xbf16>, vector<16x256xf32> -> vector<16x256xf32>
    %226 = arith.addf %189, %225 : vector<16x256xf32>
    %c0_70 = arith.constant 0 : index
    %c0_71 = arith.constant 0 : index
    %227 = vector.load %arg6[%c0_70, %c0_71] : memref<16x1xf32, #tpu.memory_space<vmem>>, vector<16x1xf32>
    %228 = vector.broadcast %227 : vector<16x1xf32> to vector<16x256xf32>
    %229 = arith.addf %226, %228 : vector<16x256xf32>
    %230 = arith.negf %229 : vector<16x256xf32>
    %231 = math.exp %230 : vector<16x256xf32>
    %cst_72 = arith.constant 1.000000e+00 : f32
    %232 = vector.broadcast %cst_72 : f32 to vector<16x256xf32>
    %233 = arith.addf %232, %231 : vector<16x256xf32>
    %234 = arith.divf %232, %233 : vector<16x256xf32>
    %235 = arith.mulf %229, %234 : vector<16x256xf32>
    %c0_73 = arith.constant 0 : index
    %c0_74 = arith.constant 0 : index
    %c0_75 = arith.constant 0 : index
    %236 = vector.load %arg7[%c0_73, %c0_74, %c0_75] : memref<1x16x256xf32, #tpu.memory_space<vmem>>, vector<1x16x256xf32>
    %237 = vector.shape_cast %236 : vector<1x16x256xf32> to vector<16x256xf32>
    %238 = vector.shape_cast %235 : vector<16x256xf32> to vector<1x16x256xf32>
    tpu.vector_store %arg7[%c0_73, %c0_74, %c0_75], %238 {strides = array<i32>} : memref<1x16x256xf32, #tpu.memory_space<vmem>>, vector<1x16x256xf32>,
    return
  }
  func.func @transform_0(%arg0: i32) -> (i32, i32) {
    %c0_i32 = arith.constant 0 : i32
    %c0_i32_0 = arith.constant 0 : i32
    %c0_i32_1 = arith.constant 0 : i32
    return %c0_i32, %c0_i32_0 : i32, i32
  }
  func.func @transform_1(%arg0: i32) -> (i32, i32, i32) {
    %c0_i32 = arith.constant 0 : i32
    %c0_i32_0 = arith.constant 0 : i32
    %c0_i32_1 = arith.constant 0 : i32
    return %arg0, %c0_i32, %c0_i32_0 : i32, i32, i32
  }
  func.func @transform_2(%arg0: i32) -> (i32, i32) {
    %c0_i32 = arith.constant 0 : i32
    %c0_i32_0 = arith.constant 0 : i32
    %c0_i32_1 = arith.constant 0 : i32
    return %c0_i32, %c0_i32_0 : i32, i32
  }
  func.func @transform_3(%arg0: i32) -> (i32, i32) {
    %c0_i32 = arith.constant 0 : i32
    %c0_i32_0 = arith.constant 0 : i32
    %c0_i32_1 = arith.constant 0 : i32
    return %c0_i32, %c0_i32_0 : i32, i32
  }
  func.func @transform_4(%arg0: i32) -> (i32, i32, i32) {
    %c0_i32 = arith.constant 0 : i32
    %c0_i32_0 = arith.constant 0 : i32
    %c0_i32_1 = arith.constant 0 : i32
    %c0_i32_2 = arith.constant 0 : i32
    return %c0_i32, %c0_i32_0, %c0_i32_1 : i32, i32, i32
  }
  func.func @transform_5(%arg0: i32) -> (i32, i32) {
    %c0_i32 = arith.constant 0 : i32
    %c0_i32_0 = arith.constant 0 : i32
    %c0_i32_1 = arith.constant 0 : i32
    return %c0_i32, %c0_i32_0 : i32, i32
  }
  func.func @transform_6(%arg0: i32) -> (i32, i32, i32) {
    %c0_i32 = arith.constant 0 : i32
    %c0_i32_0 = arith.constant 0 : i32
    %c0_i32_1 = arith.constant 0 : i32
    return %arg0, %c0_i32, %c0_i32_0 : i32, i32, i32
  }
}

</mosaic_0001>

<llo_original>
// kernel: tpu_custom_call.1
$region0: #{tpu_custom_call.1}
  #allocation0 [shape = 'u32[]', space=smem, size = 0x4, offset = 0x4, fixed_abs, tag = 'smem constant byte address 0x4 - core index']
  #allocation1 [shape = 'u32[144,128]{1,0:T(1,128)}', space=vmem, size = 0x12000, scoped, tag = 'internal scratch']
  %s0 = inlined_call_operand.vmem [shape: s32[2,256], index: 0, kind: input, shape index: {}]
  %s1 = inlined_call_operand.vmem [shape: bf16[2,16,256], index: 1, kind: input, shape index: {}]
  %s2 = inlined_call_operand.vmem [shape: bf16[8,16], index: 2, kind: input, shape index: {}]
  %s3 = inlined_call_operand.vmem [shape: f32[8,1], index: 3, kind: input, shape index: {}]
  %s4 = inlined_call_operand.vmem [shape: bf16[4,16,8], index: 4, kind: input, shape index: {}]
  %s5 = inlined_call_operand.vmem [shape: f32[16,1], index: 5, kind: input, shape index: {}]
  %s6 = inlined_call_operand.hbm [shape: f32[2,16,256], index: 6, kind: output, shape index: {}]
  %s7 = sld [smem:[#allocation0]]
  $region57: #{tpu_custom_call.1} parent=0
    _
  %s9 = ssub.s32 1, %s7
  %s10 = scalar_select 0, %s9, %s7
  $region1: #{tpu_custom_call.1} parent=0
    #allocation2 [shape = 'u8[32768]{0}', space=vmem, size = 0x8000, scoped, tag = 'output window, operand 0']
    #allocation3 [shape = 's32[2]{0}', space=sflag, size = 0x8, scoped, tag = 'scoped memory for tpu_custom_call.1']
    %11 = vsyncpa [#allocation3], 0
    %s12 = scalar_lea.sflag [#allocation3], 1
    %13 = vsyncpa %s12, 0
    loop: start=0, step=1, limit=4
    $region2: #{tpu_custom_call.1} parent=1 // loop_pre_header
      _
    $region3: #{tpu_custom_call.1} parent=1 // loop_header
      %s15 = sphi 0, %s19
      %p16 = scmp.ge.s32.totalorder %s15, 4
      %s23 = sphi 0, %s23
      %s25 = sphi 0, %s23
      %s26 = sphi 0, %s25
      %s40 = sphi 0, %s26
      %s46 = sphi 0, %s48
      %s49 = sphi 0, %s46
      %s50 = sphi 0, %s49
      %s66 = sphi 0, %s50
      %s70 = sphi 0, %s70
      %s72 = sphi 0, %s70
      %s73 = sphi 0, %s72
      %s87 = sphi 0, %s73
      %s91 = sphi 0, %s91
      %s93 = sphi 0, %s91
      %s94 = sphi 0, %s93
      %s108 = sphi 0, %s94
      %s112 = sphi 0, %s112
      %s114 = sphi 0, %s112
      %s115 = sphi 0, %s114
      %s129 = sphi 0, %s115
      %s133 = sphi 0, %s133
      %s135 = sphi 0, %s133
      %s136 = sphi 0, %s135
      %s150 = sphi 0, %s136
      %s156 = sphi 0, %s158
      %s159 = sphi 0, %s156
      %s160 = sphi 0, %s159
      %s176 = sphi 0, %s160
    $region4: #{tpu_custom_call.1} parent=1 // loop_header_branch
      %18 = sbr.rel (%p16) target = $region8
    $region5: #{tpu_custom_call.1} parent=1 // loop_body
      %s20 = ssub.s32 %s15, 1
      %s21 = ssub.s32 %s15, 2
      %s22 = sadd.s32 %s15, 1
      %s24 = sadd.s32 %s23, 1
      %p27 = scmp.eq.s32.totalorder %s15, 1
      %p28 = scmp.ne.s32.totalorder %s23, %s25
      %p29 = scmp.eq.s32.totalorder %s15, 0
      %p30 = por %p28, %p29
      %p31 = scmp.ne.s32.totalorder %s23, %s25
      %p32 = scmp.eq.s32.totalorder %s20, 1
      %p33 = por %p31, %p32
      %p34 = scmp.ne.s32.totalorder %s25, %s26
      %p35 = scmp.eq.s32.totalorder %s20, 0
      %p36 = por %p34, %p35
      %p37 = scmp.ne.s32.totalorder %s25, %s26
      %p38 = scmp.eq.s32.totalorder %s21, 1
      %p39 = por %p37, %p38
      %p41 = scmp.ne.s32.totalorder %s26, %s40
      %p42 = scmp.eq.s32.totalorder %s21, 0
      %p43 = por %p41, %p42
      %s44 = ssub.s32 %s15, %s22
      %p45 = scmp.eq.s32.totalorder %s44, 0
      %s47 = sadd.s32 %s46, 1
      %s48 = scalar_select %p45, %s46, %s47
      %p51 = pneg %p45
      %p52 = scmp.eq.s32.totalorder %s15, 1
      %p53 = por %p51, %p52
      %p54 = scmp.ne.s32.totalorder %s46, %s49
      %p55 = scmp.eq.s32.totalorder %s15, 0
      %p56 = por %p54, %p55
      %p57 = scmp.ne.s32.totalorder %s46, %s49
      %p58 = scmp.eq.s32.totalorder %s20, 1
      %p59 = por %p57, %p58
      %p60 = scmp.ne.s32.totalorder %s49, %s50
      %p61 = scmp.eq.s32.totalorder %s20, 0
      %p62 = por %p60, %p61
      %p63 = scmp.ne.s32.totalorder %s49, %s50
      %p64 = scmp.eq.s32.totalorder %s21, 1
      %p65 = por %p63, %p64
      %p67 = scmp.ne.s32.totalorder %s50, %s66
      %p68 = scmp.eq.s32.totalorder %s21, 0
      %p69 = por %p67, %p68
      %s71 = sadd.s32 %s70, 1
      %p74 = scmp.eq.s32.totalorder %s15, 1
      %p75 = scmp.ne.s32.totalorder %s70, %s72
      %p76 = scmp.eq.s32.totalorder %s15, 0
      %p77 = por %p75, %p76
      %p78 = scmp.ne.s32.totalorder %s70, %s72
      %p79 = scmp.eq.s32.totalorder %s20, 1
      %p80 = por %p78, %p79
      %p81 = scmp.ne.s32.totalorder %s72, %s73
      %p82 = scmp.eq.s32.totalorder %s20, 0
      %p83 = por %p81, %p82
      %p84 = scmp.ne.s32.totalorder %s72, %s73
      %p85 = scmp.eq.s32.totalorder %s21, 1
      %p86 = por %p84, %p85
      %p88 = scmp.ne.s32.totalorder %s73, %s87
      %p89 = scmp.eq.s32.totalorder %s21, 0
      %p90 = por %p88, %p89
      %s92 = sadd.s32 %s91, 1
      %p95 = scmp.eq.s32.totalorder %s15, 1
      %p96 = scmp.ne.s32.totalorder %s91, %s93
      %p97 = scmp.eq.s32.totalorder %s15, 0
      %p98 = por %p96, %p97
      %p99 = scmp.ne.s32.totalorder %s91, %s93
      %p100 = scmp.eq.s32.totalorder %s20, 1
      %p101 = por %p99, %p100
      %p102 = scmp.ne.s32.totalorder %s93, %s94
      %p103 = scmp.eq.s32.totalorder %s20, 0
      %p104 = por %p102, %p103
      %p105 = scmp.ne.s32.totalorder %s93, %s94
      %p106 = scmp.eq.s32.totalorder %s21, 1
      %p107 = por %p105, %p106
      %p109 = scmp.ne.s32.totalorder %s94, %s108
      %p110 = scmp.eq.s32.totalorder %s21, 0
      %p111 = por %p109, %p110
      %s113 = sadd.s32 %s112, 1
      %p116 = scmp.eq.s32.totalorder %s15, 1
      %p117 = scmp.ne.s32.totalorder %s112, %s114
      %p118 = scmp.eq.s32.totalorder %s15, 0
      %p119 = por %p117, %p118
      %p120 = scmp.ne.s32.totalorder %s112, %s114
      %p121 = scmp.eq.s32.totalorder %s20, 1
      %p122 = por %p120, %p121
      %p123 = scmp.ne.s32.totalorder %s114, %s115
      %p124 = scmp.eq.s32.totalorder %s20, 0
      %p125 = por %p123, %p124
      %p126 = scmp.ne.s32.totalorder %s114, %s115
      %p127 = scmp.eq.s32.totalorder %s21, 1
      %p128 = por %p126, %p127
      %p130 = scmp.ne.s32.totalorder %s115, %s129
      %p131 = scmp.eq.s32.totalorder %s21, 0
      %p132 = por %p130, %p131
      %s134 = sadd.s32 %s133, 1
      %p137 = scmp.eq.s32.totalorder %s15, 1
      %p138 = scmp.ne.s32.totalorder %s133, %s135
      %p139 = scmp.eq.s32.totalorder %s15, 0
      %p140 = por %p138, %p139
      %p141 = scmp.ne.s32.totalorder %s133, %s135
      %p142 = scmp.eq.s32.totalorder %s20, 1
      %p143 = por %p141, %p142
      %p144 = scmp.ne.s32.totalorder %s135, %s136
      %p145 = scmp.eq.s32.totalorder %s20, 0
      %p146 = por %p144, %p145
      %p147 = scmp.ne.s32.totalorder %s135, %s136
      %p148 = scmp.eq.s32.totalorder %s21, 1
      %p149 = por %p147, %p148
      %p151 = scmp.ne.s32.totalorder %s136, %s150
      %p152 = scmp.eq.s32.totalorder %s21, 0
      %p153 = por %p151, %p152
      %s154 = ssub.s32 %s15, %s22
      %p155 = scmp.eq.s32.totalorder %s154, 0
      %s157 = sadd.s32 %s156, 1
      %s158 = scalar_select %p155, %s156, %s157
      %p161 = pneg %p155
      %p162 = scmp.eq.s32.totalorder %s15, 1
      %p163 = por %p161, %p162
      %p164 = scmp.ne.s32.totalorder %s156, %s159
      %p165 = scmp.eq.s32.totalorder %s15, 0
      %p166 = por %p164, %p165
      %p167 = scmp.ne.s32.totalorder %s156, %s159
      %p168 = scmp.eq.s32.totalorder %s20, 1
      %p169 = por %p167, %p168
      %p170 = scmp.ne.s32.totalorder %s159, %s160
      %p171 = scmp.eq.s32.totalorder %s20, 0
      %p172 = por %p170, %p171
      %p173 = scmp.ne.s32.totalorder %s159, %s160
      %p174 = scmp.eq.s32.totalorder %s21, 1
      %p175 = por %p173, %p174
      %p177 = scmp.ne.s32.totalorder %s160, %s176
      %p178 = scmp.eq.s32.totalorder %s21, 0
      %p179 = por %p177, %p178
      %p180 = scmp.le.s32.totalorder 1, %s15
      %p181 = scmp.lt.s32.totalorder %s15, 3
      %p182 = pnand %p180, %p181
      %p183 = pneg %p182
      // Predicated region
      $region9: #{tpu_custom_call.1} parent=5 // pred_check
        _
      $region10: #{tpu_custom_call.1} parent=5 // pred_check_branch
        %185 = sbr.rel (%p182) target = $region12
      $region11: #{tpu_custom_call.1} parent=5 // pred_region
        %s186 = ssub.s32 %s15, 1
        // Predicated region
        $region13: #{tpu_custom_call.1} parent=11 // pred_check
          %p187 = pneg %p36
        $region14: #{tpu_custom_call.1} parent=11 // pred_check_branch
          %189 = sbr.rel (%p187) target = $region16
        $region15: #{tpu_custom_call.1} parent=11 // pred_region
          _
        $region16: #{tpu_custom_call.1} parent=11 // pred_fallthru
          _
        // Predicated region
        $region17: #{tpu_custom_call.1} parent=11 // pred_check
          %p190 = pneg %p83
        $region18: #{tpu_custom_call.1} parent=11 // pred_check_branch
          %192 = sbr.rel (%p190) target = $region20
        $region19: #{tpu_custom_call.1} parent=11 // pred_region
          _
        $region20: #{tpu_custom_call.1} parent=11 // pred_fallthru
          _
        // Predicated region
        $region21: #{tpu_custom_call.1} parent=11 // pred_check
          %p193 = pneg %p104
        $region22: #{tpu_custom_call.1} parent=11 // pred_check_branch
          %195 = sbr.rel (%p193) target = $region24
        $region23: #{tpu_custom_call.1} parent=11 // pred_region
          _
        $region24: #{tpu_custom_call.1} parent=11 // pred_fallthru
          _
        // Predicated region
        $region25: #{tpu_custom_call.1} parent=11 // pred_check
          %p196 = pneg %p125
        $region26: #{tpu_custom_call.1} parent=11 // pred_check_branch
          %198 = sbr.rel (%p196) target = $region28
        $region27: #{tpu_custom_call.1} parent=11 // pred_region
          _
        $region28: #{tpu_custom_call.1} parent=11 // pred_fallthru
          _
        // Predicated region
        $region29: #{tpu_custom_call.1} parent=11 // pred_check
          %p199 = pneg %p146
        $region30: #{tpu_custom_call.1} parent=11 // pred_check_branch
          %201 = sbr.rel (%p199) target = $region32
        $region31: #{tpu_custom_call.1} parent=11 // pred_region
          _
        $region32: #{tpu_custom_call.1} parent=11 // pred_fallthru
          _
      $region12: #{tpu_custom_call.1} parent=5 // pred_fallthru
        _
      %p202 = scmp.lt.s32.totalorder %s15, 2
      // Predicated region
      $region33: #{tpu_custom_call.1} parent=5 // pred_check
        %p203 = pneg %p202
      $region34: #{tpu_custom_call.1} parent=5 // pred_check_branch
        %205 = sbr.rel (%p203) target = $region36
      $region35: #{tpu_custom_call.1} parent=5 // pred_region
        // Predicated region
        $region37: #{tpu_custom_call.1} parent=35 // pred_check
          %p206 = pneg %p56
        $region38: #{tpu_custom_call.1} parent=35 // pred_check_branch
          %208 = sbr.rel (%p206) target = $region40
        $region39: #{tpu_custom_call.1} parent=35 // pred_region
          %p209 = scmp.lt.s32.totalorder %s15, 1
          %s210 = scalar_select %p209, %s15, 1
          %s211 = smul.addr %s210, 4
          %s212 = smul.addr %s211, 4
          %s213 = scalar_lea.vmem %s1, %s212
        $region40: #{tpu_custom_call.1} parent=35 // pred_fallthru
          _
      $region36: #{tpu_custom_call.1} parent=5 // pred_fallthru
        _
      %p214 = scmp.le.s32.totalorder 1, %s15
      %p215 = scmp.lt.s32.totalorder %s15, 3
      %p216 = pnand %p214, %p215
      %p217 = pneg %p216
      // Predicated region
      $region41: #{tpu_custom_call.1} parent=5 // pred_check
        _
      $region42: #{tpu_custom_call.1} parent=5 // pred_check_branch
        %219 = sbr.rel (%p216) target = $region44
      $region43: #{tpu_custom_call.1} parent=5 // pred_region
        %s220 = ssub.s32 %s15, 1
        %p221 = pneg %p36
        %p222 = pneg %p33
        %p223 = scmp.lt.s32.totalorder %s20, 1
        %s224 = scalar_select %p223, %s20, 1
        %s225 = smul.addr %s224, 4
        %s226 = smul.addr %s225, 4
        %s227 = scalar_lea.vmem %s1, %s226
        %p228 = pneg %p62
        %p229 = pneg %p59
        %p230 = pneg %p83
        %p231 = pneg %p80
        %p232 = pneg %p104
        %p233 = pneg %p101
        %p234 = pneg %p125
        %p235 = pneg %p122
        %p236 = pneg %p146
        %p237 = pneg %p143
        %p238 = pneg %p172
        %p239 = pneg %p169
        %s240 = sand.u32 %s159, 1
        %s241 = scalar_lea.sflag [#allocation3], %s240
        %s242 = sand.u32 %s159, 1
        %s243 = smul.addr %s242, 32
        %s244 = scalar_lea.vmem [#allocation2], %s243
        %p245 = scmp.lt.s32.totalorder %s20, 1
        %s246 = scalar_select %p245, %s20, 1
        %s247 = smul.addr %s246, 4
        %s248 = smul.addr %s247, 4
        %s249 = scalar_lea.vmem %s1, %s248
        %v251 = vld [vmem:[%s249] sm:$0xff]
        %v252 = vld [vmem:[%s249 + $0x8] sm:$0xff]
        %v253 = vld [vmem:[%s2] sm:$0xf]
        %v254 = vld [vmem:[%s3] sm:$0xff]
        %256 = vset.pattern.permute.xlu0 0
        %257 = vperm.xlu0 %256, %v254
        %v258 = vpop.permute.xlu0 %257
        %v262 = vunpack.c.l.b16 %v251
        %v263 = vunpack.c.h.b16 %v251
        %v264 = vunpack.c.l.b16 %v252
        %v265 = vunpack.c.h.b16 %v252
        %v266 = vpack.c.b16 %v264, %v262
        %v267 = vpack.c.b16 %v265, %v263
        %vm270 = vcmask 130048
        %v272 = vsel %vm270, %v253, 0
        %274 = vmatprep.subr.bf16.mxu0 %v267
        %275 = vmatpush1.bf16.msra.mxu0 %v266
        %276 = vmatprep.subr.bf16.mxu0 0
        %277 = vmatpush1.bf16.msra.mxu0 0
        %278 = vmatprep.subr.bf16.mxu0 0
        %279 = vmatpush1.bf16.msra.mxu0 0
        %280 = vmatprep.subr.bf16.mxu0 0
        %281 = vmatpush1.bf16.msra.mxu0 0
        %282 = vmatprep.subr.bf16.mxu0 0
        %283 = vmatpush1.bf16.msra.mxu0 0
        %284 = vmatprep.subr.bf16.mxu0 0
        %285 = vmatpush1.bf16.msra.mxu0 0
        %286 = vmatprep.subr.bf16.mxu0 0
        %287 = vmatpush1.bf16.msra.mxu0 0
        %288 = vmatprep.subr.bf16.mxu0 0
        %289 = vmatpush1.bf16.msra.mxu0 0
        %290 = vmatprep.subr.bf16.mxu0 0
        %291 = vmatpush1.bf16.msra.mxu0 0
        %292 = vmatprep.subr.bf16.mxu0 0
        %293 = vmatpush1.bf16.msra.mxu0 0
        %294 = vmatprep.subr.bf16.mxu0 0
        %295 = vmatpush1.bf16.msra.mxu0 0
        %296 = vmatprep.subr.bf16.mxu0 0
        %297 = vmatpush1.bf16.msra.mxu0 0
        %298 = vmatprep.subr.bf16.mxu0 0
        %299 = vmatpush1.bf16.msra.mxu0 0
        %300 = vmatprep.subr.bf16.mxu0 0
        %301 = vmatpush1.bf16.msra.mxu0 0
        %302 = vmatprep.subr.bf16.mxu0 0
        %303 = vmatpush1.bf16.msra.mxu0 0
        %304 = vmatprep.subr.bf16.mxu0 0
        %305 = vmatpush1.bf16.msra.mxu0 0
        %306 = vmatprep.mubr.bf16.mxu0 0
        %307 = vmatmul.mubr.bf16.gmra.mrb[0].mxu0 %v272
        %v308 = vpop.f32.mrb[0].mxu0
        %v309 = vadd.f32 %v258, %v308
        %v310 = vpop.f32.mrb[0].mxu0
        %v311 = vadd.f32 %v258, %v310
        %v312 = vpop.f32.mrb[0].mxu0
        %v313 = vpop.f32.mrb[0].mxu0
        %314 = vdwg.mxu0
        %v315 = vxor.u32 %v309, 2147483648
        %v316 = vxor.u32 %v311, 2147483648
        %v317 = vmul.f32 %v315, 1.442695
        %v318 = vpow.pop %v317
        %v319 = vmul.f32 %v316, 1.442695
        %v320 = vpow.pop %v319
        %v321 = vadd.f32 %v318, 1.0
        %v322 = vadd.f32 %v320, 1.0
        %v323 = vrcp.pop %v321
        %v324 = vmul.f32 1.0, %v323
        %v325 = vrcp.pop %v322
        %v326 = vmul.f32 1.0, %v325
        %v327 = vmul.f32 %v309, %v324
        %v328 = vmul.f32 %v311, %v326
        %v329 = vld [vmem:[%s0] sm:$0xf]
        %v331 = vunpack.c.l.s4 1983009808
        %v332 = vunpack.c.0.s8 %v331
        %v333 = vlaneseq
        %v334 = vshrl.u32 %v333, 7
        %v335 = vsub.s32 %v332, %v334
        %v336 = vrot.slane %v329, %v335
        %v337 = vcombine.high %v336, %v336
        %338 = vrot.lane.b32.xlu0 %v336, 1
        %v339 = vpop.permute.xlu0 %338
        %340 = vrot.lane.b32.xlu0 %v337, 1
        %v341 = vpop.permute.xlu0 %340
        %v342 = vlaneseq
        %v343 = vand.u32 %v342, 127
        %vm344 = vcmp.lt.s32.totalorder %v343, 1
        %v345 = vsel %vm344, %v339, %v341
        %v346 = vsel %vm344, %v341, %v339
        %v347 = vlaneseq
        %v348 = vshrl.u32 %v347, 7
        %v349 = vsub.s32 0, %v348
        %v350 = vrot.slane %v329, %v349
        %v351 = vlaneseq
        %v352 = vshrl.u32 %v351, 7
        %v353 = vsub.s32 2, %v352
        %v354 = vrot.slane %v329, %v353
        %vm355 = vcmp.eq.s32.totalorder %v346, %v350
        %vm356 = vcmp.eq.s32.totalorder %v345, %v354
        %v357 = vlaneseq
        %v358 = vshrl.u32 %v357, 7
        %v359 = vsub.s32 1, %v358
        %v360 = vrot.slane %v329, %v359
        %v361 = vlaneseq
        %v362 = vshrl.u32 %v361, 7
        %v363 = vsub.s32 3, %v362
        %v364 = vrot.slane %v329, %v363
        %v365 = vsub.s32 %v346, %v360
        %v366 = vsub.s32 %v345, %v364
        %vm367 = vcmp.lt.s32.totalorder %v365, 0
        %v368 = vsub.s32 0, %v365
        %v369 = vsel %vm367, %v368, %v365
        %vm370 = vcmp.lt.s32.totalorder %v366, 0
        %v371 = vsub.s32 0, %v366
        %v372 = vsel %vm370, %v371, %v366
        %vm373 = vcmp.le.s32.totalorder %v369, 2
        %vm374 = vcmp.le.s32.totalorder %v372, 2
        %v375 = vsel %vm373, 1, 0
        %v376 = vsel %vm374, 1, 0
        %v377 = vrot.slane %v375, 1
        %v378 = vrot.slane %v376, 1
        %vm379 = vcmp.ne.s32.totalorder %v377, 0
        %vm380 = vcmp.ne.s32.totalorder %v378, 0
        %vm381 = vmand %vm355, %vm379
        %vm382 = vmand %vm356, %vm380
        %v383 = vsel %vm381, 0.0, -inf
        %v384 = vsel %vm382, 0.0, -inf
        %385 = vrot.lane.b32.xlu0 %v336, 2
        %v386 = vpop.permute.xlu0 %385
        %387 = vrot.lane.b32.xlu0 %v337, 2
        %v388 = vpop.permute.xlu0 %387
        %vm389 = vcmp.lt.s32.totalorder %v343, 2
        %v390 = vsel %vm389, %v386, %v388
        %v391 = vsel %vm389, %v388, %v386
        %vm392 = vcmp.eq.s32.totalorder %v391, %v350
        %vm393 = vcmp.eq.s32.totalorder %v390, %v354
        %v394 = vsub.s32 %v391, %v360
        %v395 = vsub.s32 %v390, %v364
        %vm396 = vcmp.lt.s32.totalorder %v394, 0
        %v397 = vsub.s32 0, %v394
        %v398 = vsel %vm396, %v397, %v394
        %vm399 = vcmp.lt.s32.totalorder %v395, 0
        %v400 = vsub.s32 0, %v395
        %v401 = vsel %vm399, %v400, %v395
        %vm402 = vcmp.le.s32.totalorder %v398, 2
        %vm403 = vcmp.le.s32.totalorder %v401, 2
        %v404 = vsel %vm402, 1, 0
        %v405 = vsel %vm403, 1, 0
        %v406 = vrot.slane %v404, 1
        %v407 = vrot.slane %v405, 1
        %vm408 = vcmp.ne.s32.totalorder %v406, 0
        %vm409 = vcmp.ne.s32.totalorder %v407, 0
        %vm410 = vmand %vm392, %vm408
        %vm411 = vmand %vm393, %vm409
        %v412 = vsel %vm410, 0.0, -inf
        %v413 = vsel %vm411, 0.0, -inf
        %414 = vrot.lane.b32.xlu0 %v336, 127
        %v415 = vpop.permute.xlu0 %414
        %416 = vrot.lane.b32.xlu0 %v337, 127
        %v417 = vpop.permute.xlu0 %416
        %vm418 = vcmp.lt.s32.totalorder %v343, 127
        %v419 = vsel %vm418, %v415, %v417
        %v420 = vsel %vm418, %v417, %v415
        %vm421 = vcmp.eq.s32.totalorder %v419, %v350
        %vm422 = vcmp.eq.s32.totalorder %v420, %v354
        %v423 = vsub.s32 %v419, %v360
        %v424 = vsub.s32 %v420, %v364
        %vm425 = vcmp.lt.s32.totalorder %v423, 0
        %v426 = vsub.s32 0, %v423
        %v427 = vsel %vm425, %v426, %v423
        %vm428 = vcmp.lt.s32.totalorder %v424, 0
        %v429 = vsub.s32 0, %v424
        %v430 = vsel %vm428, %v429, %v424
        %vm431 = vcmp.le.s32.totalorder %v427, 2
        %vm432 = vcmp.le.s32.totalorder %v430, 2
        %v433 = vsel %vm431, 1, 0
        %v434 = vsel %vm432, 1, 0
        %v435 = vrot.slane %v433, 1
        %v436 = vrot.slane %v434, 1
        %vm437 = vcmp.ne.s32.totalorder %v435, 0
        %vm438 = vcmp.ne.s32.totalorder %v436, 0
        %vm439 = vmand %vm421, %vm437
        %vm440 = vmand %vm422, %vm438
        %v441 = vsel %vm439, 0.0, -inf
        %v442 = vsel %vm440, 0.0, -inf
        %443 = vrot.lane.b32.xlu0 %v336, 126
        %v444 = vpop.permute.xlu0 %443
        %445 = vrot.lane.b32.xlu0 %v337, 126
        %v446 = vpop.permute.xlu0 %445
        %vm447 = vcmp.lt.s32.totalorder %v343, 126
        %v448 = vsel %vm447, %v444, %v446
        %v449 = vsel %vm447, %v446, %v444
        %vm450 = vcmp.eq.s32.totalorder %v448, %v350
        %vm451 = vcmp.eq.s32.totalorder %v449, %v354
        %v452 = vsub.s32 %v448, %v360
        %v453 = vsub.s32 %v449, %v364
        %vm454 = vcmp.lt.s32.totalorder %v452, 0
        %v455 = vsub.s32 0, %v452
        %v456 = vsel %vm454, %v455, %v452
        %vm457 = vcmp.lt.s32.totalorder %v453, 0
        %v458 = vsub.s32 0, %v453
        %v459 = vsel %vm457, %v458, %v453
        %vm460 = vcmp.le.s32.totalorder %v456, 2
        %vm461 = vcmp.le.s32.totalorder %v459, 2
        %v462 = vsel %vm460, 1, 0
        %v463 = vsel %vm461, 1, 0
        %v464 = vrot.slane %v462, 1
        %v465 = vrot.slane %v463, 1
        %vm466 = vcmp.ne.s32.totalorder %v464, 0
        %vm467 = vcmp.ne.s32.totalorder %v465, 0
        %vm468 = vmand %vm450, %vm466
        %vm469 = vmand %vm451, %vm467
        %v470 = vsel %vm468, 0.0, -inf
        %v471 = vsel %vm469, 0.0, -inf
        %472 = vrot.lane.b32.xlu0 %v336, 16
        %v473 = vpop.permute.xlu0 %472
        %474 = vrot.lane.b32.xlu0 %v337, 16
        %v475 = vpop.permute.xlu0 %474
        %vm476 = vcmp.lt.s32.totalorder %v343, 16
        %v477 = vsel %vm476, %v473, %v475
        %v478 = vsel %vm476, %v475, %v473
        %vm479 = vcmp.eq.s32.totalorder %v478, %v360
        %vm480 = vcmp.eq.s32.totalorder %v477, %v364
        %v481 = vsub.s32 %v478, %v350
        %v482 = vsub.s32 %v477, %v354
        %vm483 = vcmp.lt.s32.totalorder %v481, 0
        %v484 = vsub.s32 0, %v481
        %v485 = vsel %vm483, %v484, %v481
        %vm486 = vcmp.lt.s32.totalorder %v482, 0
        %v487 = vsub.s32 0, %v482
        %v488 = vsel %vm486, %v487, %v482
        %vm489 = vcmp.le.s32.totalorder %v485, 2
        %vm490 = vcmp.le.s32.totalorder %v488, 2
        %v491 = vsel %vm489, 1, 0
        %v492 = vsel %vm490, 1, 0
        %v493 = vrot.slane %v491, 7
        %v494 = vrot.slane %v492, 7
        %vm495 = vcmp.ne.s32.totalorder %v493, 0
        %vm496 = vcmp.ne.s32.totalorder %v494, 0
        %vm497 = vmand %vm479, %vm495
        %vm498 = vmand %vm480, %vm496
        %v499 = vsel %vm497, 0.0, -inf
        %v500 = vsel %vm498, 0.0, -inf
        %501 = vrot.lane.b32.xlu0 %v336, 32
        %v502 = vpop.permute.xlu0 %501
        %503 = vrot.lane.b32.xlu0 %v337, 32
        %v504 = vpop.permute.xlu0 %503
        %vm505 = vcmp.lt.s32.totalorder %v343, 32
        %v506 = vsel %vm505, %v502, %v504
        %v507 = vsel %vm505, %v504, %v502
        %vm508 = vcmp.eq.s32.totalorder %v507, %v360
        %vm509 = vcmp.eq.s32.totalorder %v506, %v364
        %v510 = vsub.s32 %v507, %v350
        %v511 = vsub.s32 %v506, %v354
        %vm512 = vcmp.lt.s32.totalorder %v510, 0
        %v513 = vsub.s32 0, %v510
        %v514 = vsel %vm512, %v513, %v510
        %vm515 = vcmp.lt.s32.totalorder %v511, 0
        %v516 = vsub.s32 0, %v511
        %v517 = vsel %vm515, %v516, %v511
        %vm518 = vcmp.le.s32.totalorder %v514, 2
        %vm519 = vcmp.le.s32.totalorder %v517, 2
        %v520 = vsel %vm518, 1, 0
        %v521 = vsel %vm519, 1, 0
        %v522 = vrot.slane %v520, 7
        %v523 = vrot.slane %v521, 7
        %vm524 = vcmp.ne.s32.totalorder %v522, 0
        %vm525 = vcmp.ne.s32.totalorder %v523, 0
        %vm526 = vmand %vm508, %vm524
        %vm527 = vmand %vm509, %vm525
        %v528 = vsel %vm526, 0.0, -inf
        %v529 = vsel %vm527, 0.0, -inf
        %530 = vrot.lane.b32.xlu0 %v336, 112
        %v531 = vpop.permute.xlu0 %530
        %532 = vrot.lane.b32.xlu0 %v337, 112
        %v533 = vpop.permute.xlu0 %532
        %vm534 = vcmp.lt.s32.totalorder %v343, 112
        %v535 = vsel %vm534, %v531, %v533
        %v536 = vsel %vm534, %v533, %v531
        %vm537 = vcmp.eq.s32.totalorder %v535, %v360
        %vm538 = vcmp.eq.s32.totalorder %v536, %v364
        %v539 = vsub.s32 %v535, %v350
        %v540 = vsub.s32 %v536, %v354
        %vm541 = vcmp.lt.s32.totalorder %v539, 0
        %v542 = vsub.s32 0, %v539
        %v543 = vsel %vm541, %v542, %v539
        %vm544 = vcmp.lt.s32.totalorder %v540, 0
        %v545 = vsub.s32 0, %v540
        %v546 = vsel %vm544, %v545, %v540
        %vm547 = vcmp.le.s32.totalorder %v543, 2
        %vm548 = vcmp.le.s32.totalorder %v546, 2
        %v549 = vsel %vm547, 1, 0
        %v550 = vsel %vm548, 1, 0
        %v551 = vrot.slane %v549, 7
        %v552 = vrot.slane %v550, 7
        %vm553 = vcmp.ne.s32.totalorder %v551, 0
        %vm554 = vcmp.ne.s32.totalorder %v552, 0
        %vm555 = vmand %vm537, %vm553
        %vm556 = vmand %vm538, %vm554
        %v557 = vsel %vm555, 0.0, -inf
        %v558 = vsel %vm556, 0.0, -inf
        %559 = vrot.lane.b32.xlu0 %v336, 96
        %v560 = vpop.permute.xlu0 %559
        %561 = vrot.lane.b32.xlu0 %v337, 96
        %v562 = vpop.permute.xlu0 %561
        %vm563 = vcmp.lt.s32.totalorder %v343, 96
        %v564 = vsel %vm563, %v560, %v562
        %v565 = vsel %vm563, %v562, %v560
        %vm566 = vcmp.eq.s32.totalorder %v564, %v360
        %vm567 = vcmp.eq.s32.totalorder %v565, %v364
        %v568 = vsub.s32 %v564, %v350
        %v569 = vsub.s32 %v565, %v354
        %vm570 = vcmp.lt.s32.totalorder %v568, 0
        %v571 = vsub.s32 0, %v568
        %v572 = vsel %vm570, %v571, %v568
        %vm573 = vcmp.lt.s32.totalorder %v569, 0
        %v574 = vsub.s32 0, %v569
        %v575 = vsel %vm573, %v574, %v569
        %vm576 = vcmp.le.s32.totalorder %v572, 2
        %vm577 = vcmp.le.s32.totalorder %v575, 2
        %v578 = vsel %vm576, 1, 0
        %v579 = vsel %vm577, 1, 0
        %v580 = vrot.slane %v578, 7
        %v581 = vrot.slane %v579, 7
        %vm582 = vcmp.ne.s32.totalorder %v580, 0
        %vm583 = vcmp.ne.s32.totalorder %v581, 0
        %vm584 = vmand %vm566, %vm582
        %vm585 = vmand %vm567, %vm583
        %v586 = vsel %vm584, 0.0, -inf
        %v587 = vsel %vm585, 0.0, -inf
        %v588 = vld [vmem:[%s4] sm:$0xf]
        %v589 = vld [vmem:[%s4 + $0x4] sm:$0xf]
        %v590 = vpack.c.bf16 %v327, %v327
        %v591 = vpack.c.bf16 %v328, %v328
        %592 = vrot.lane.b32.xlu0 %v327, 1
        %v593 = vpop.permute.xlu0 %592
        %594 = vrot.lane.b32.xlu0 %v328, 1
        %v595 = vpop.permute.xlu0 %594
        %v596 = vsel %vm344, %v593, %v595
        %v597 = vsel %vm344, %v595, %v593
        %v598 = vlaneseq
        %v599 = vshrl.u32 %v598, 7
        %v600 = vsub.s32 0, %v599
        %v601 = vrot.slane %v383, %v600
        %v602 = vlaneseq
        %v603 = vshrl.u32 %v602, 7
        %v604 = vsub.s32 0, %v603
        %v605 = vrot.slane %v384, %v604
        %v606 = vadd.f32 %v597, %v601
        %v607 = vadd.f32 %v596, %v605
        %v608 = vmax.f32 %v327, %v606
        %v609 = vmax.f32 %v328, %v607
        %610 = vrot.lane.b32.xlu0 %v327, 2
        %v611 = vpop.permute.xlu0 %610
        %612 = vrot.lane.b32.xlu0 %v328, 2
        %v613 = vpop.permute.xlu0 %612
        %v614 = vsel %vm389, %v611, %v613
        %v615 = vsel %vm389, %v613, %v611
        %v616 = vlaneseq
        %v617 = vshrl.u32 %v616, 7
        %v618 = vsub.s32 0, %v617
        %v619 = vrot.slane %v412, %v618
        %v620 = vlaneseq
        %v621 = vshrl.u32 %v620, 7
        %v622 = vsub.s32 0, %v621
        %v623 = vrot.slane %v413, %v622
        %v624 = vadd.f32 %v615, %v619
        %v625 = vadd.f32 %v614, %v623
        %v626 = vmax.f32 %v608, %v624
        %v627 = vmax.f32 %v609, %v625
        %628 = vrot.lane.b32.xlu0 %v327, 127
        %v629 = vpop.permute.xlu0 %628
        %630 = vrot.lane.b32.xlu0 %v328, 127
        %v631 = vpop.permute.xlu0 %630
        %v632 = vsel %vm418, %v629, %v631
        %v633 = vsel %vm418, %v631, %v629
        %v634 = vlaneseq
        %v635 = vshrl.u32 %v634, 7
        %v636 = vsub.s32 0, %v635
        %v637 = vrot.slane %v441, %v636
        %v638 = vlaneseq
        %v639 = vshrl.u32 %v638, 7
        %v640 = vsub.s32 0, %v639
        %v641 = vrot.slane %v442, %v640
        %v642 = vadd.f32 %v632, %v637
        %v643 = vadd.f32 %v633, %v641
        %v644 = vmax.f32 %v626, %v642
        %v645 = vmax.f32 %v627, %v643
        %646 = vrot.lane.b32.xlu0 %v327, 126
        %v647 = vpop.permute.xlu0 %646
        %648 = vrot.lane.b32.xlu0 %v328, 126
        %v649 = vpop.permute.xlu0 %648
        %v650 = vsel %vm447, %v647, %v649
        %v651 = vsel %vm447, %v649, %v647
        %v652 = vlaneseq
        %v653 = vshrl.u32 %v652, 7
        %v654 = vsub.s32 0, %v653
        %v655 = vrot.slane %v470, %v654
        %v656 = vlaneseq
        %v657 = vshrl.u32 %v656, 7
        %v658 = vsub.s32 0, %v657
        %v659 = vrot.slane %v471, %v658
        %v660 = vadd.f32 %v650, %v655
        %v661 = vadd.f32 %v651, %v659
        %v662 = vmax.f32 %v644, %v660
        %v663 = vmax.f32 %v645, %v661
        %664 = vrot.lane.b32.xlu0 %v662, 16
        %v665 = vpop.permute.xlu0 %664
        %666 = vrot.lane.b32.xlu0 %v663, 16
        %v667 = vpop.permute.xlu0 %666
        %v668 = vsel %vm476, %v665, %v667
        %v669 = vsel %vm476, %v667, %v665
        %v670 = vlaneseq
        %v671 = vshrl.u32 %v670, 7
        %v672 = vsub.s32 1, %v671
        %v673 = vrot.slane %v499, %v672
        %v674 = vlaneseq
        %v675 = vshrl.u32 %v674, 7
        %v676 = vsub.s32 1, %v675
        %v677 = vrot.slane %v500, %v676
        %v678 = vadd.f32 %v669, %v673
        %v679 = vadd.f32 %v668, %v677
        %v680 = vmax.f32 %v662, %v678
        %v681 = vmax.f32 %v663, %v679
        %682 = vrot.lane.b32.xlu0 %v662, 32
        %v683 = vpop.permute.xlu0 %682
        %684 = vrot.lane.b32.xlu0 %v663, 32
        %v685 = vpop.permute.xlu0 %684
        %v686 = vsel %vm505, %v683, %v685
        %v687 = vsel %vm505, %v685, %v683
        %v688 = vlaneseq
        %v689 = vshrl.u32 %v688, 7
        %v690 = vsub.s32 1, %v689
        %v691 = vrot.slane %v528, %v690
        %v692 = vlaneseq
        %v693 = vshrl.u32 %v692, 7
        %v694 = vsub.s32 1, %v693
        %v695 = vrot.slane %v529, %v694
        %v696 = vadd.f32 %v687, %v691
        %v697 = vadd.f32 %v686, %v695
        %v698 = vmax.f32 %v680, %v696
        %v699 = vmax.f32 %v681, %v697
        %700 = vrot.lane.b32.xlu0 %v662, 112
        %v701 = vpop.permute.xlu0 %700
        %702 = vrot.lane.b32.xlu0 %v663, 112
        %v703 = vpop.permute.xlu0 %702
        %v704 = vsel %vm534, %v701, %v703
        %v705 = vsel %vm534, %v703, %v701
        %v706 = vlaneseq
        %v707 = vshrl.u32 %v706, 7
        %v708 = vsub.s32 1, %v707
        %v709 = vrot.slane %v557, %v708
        %v710 = vlaneseq
        %v711 = vshrl.u32 %v710, 7
        %v712 = vsub.s32 1, %v711
        %v713 = vrot.slane %v558, %v712
        %v714 = vadd.f32 %v704, %v709
        %v715 = vadd.f32 %v705, %v713
        %v716 = vmax.f32 %v698, %v714
        %v717 = vmax.f32 %v699, %v715
        %718 = vrot.lane.b32.xlu0 %v662, 96
        %v719 = vpop.permute.xlu0 %718
        %720 = vrot.lane.b32.xlu0 %v663, 96
        %v721 = vpop.permute.xlu0 %720
        %v722 = vsel %vm563, %v719, %v721
        %v723 = vsel %vm563, %v721, %v719
        %v724 = vlaneseq
        %v725 = vshrl.u32 %v724, 7
        %v726 = vsub.s32 1, %v725
        %v727 = vrot.slane %v586, %v726
        %v728 = vlaneseq
        %v729 = vshrl.u32 %v728, 7
        %v730 = vsub.s32 1, %v729
        %v731 = vrot.slane %v587, %v730
        %v732 = vadd.f32 %v722, %v727
        %v733 = vadd.f32 %v723, %v731
        %v734 = vmax.f32 %v716, %v732
        %v735 = vmax.f32 %v717, %v733
        %s736 = scalar_lea.vmem %s4, 8
        %v737 = vld [vmem:[%s736] sm:$0xf]
        %v738 = vld [vmem:[%s736 + $0x4] sm:$0xf]
        %v739 = vpack.c.bf16 %v734, %v734
        %v740 = vpack.c.bf16 %v735, %v735
        %v743 = vunpack.c.l.b16 %v737
        %v744 = vunpack.c.l.b16 %v738
        %v745 = vpack.c.b16 %v744, %v743
        %vm746 = vcmask 64512
        %v748 = vsel %vm746, %v745, 0
        %vm750 = vcmask 1043456
        %v752 = vsel %vm750, %v739, 0
        %v755 = vsel %vm750, %v740, 0
        %757 = vmatprep.subr.bf16.mxu0 %v755
        %758 = vmatpush1.bf16.msra.mxu0 %v752
        %759 = vmatprep.subr.bf16.mxu0 0
        %760 = vmatpush1.bf16.msra.mxu0 0
        %761 = vmatprep.subr.bf16.mxu0 0
        %762 = vmatpush1.bf16.msra.mxu0 0
        %763 = vmatprep.subr.bf16.mxu0 0
        %764 = vmatpush1.bf16.msra.mxu0 0
        %765 = vmatprep.subr.bf16.mxu0 0
        %766 = vmatpush1.bf16.msra.mxu0 0
        %767 = vmatprep.subr.bf16.mxu0 0
        %768 = vmatpush1.bf16.msra.mxu0 0
        %769 = vmatprep.subr.bf16.mxu0 0
        %770 = vmatpush1.bf16.msra.mxu0 0
        %771 = vmatprep.subr.bf16.mxu0 0
        %772 = vmatpush1.bf16.msra.mxu0 0
        %773 = vmatprep.subr.bf16.mxu0 0
        %774 = vmatpush1.bf16.msra.mxu0 0
        %775 = vmatprep.subr.bf16.mxu0 0
        %776 = vmatpush1.bf16.msra.mxu0 0
        %777 = vmatprep.subr.bf16.mxu0 0
        %778 = vmatpush1.bf16.msra.mxu0 0
        %779 = vmatprep.subr.bf16.mxu0 0
        %780 = vmatpush1.bf16.msra.mxu0 0
        %781 = vmatprep.subr.bf16.mxu0 0
        %782 = vmatpush1.bf16.msra.mxu0 0
        %783 = vmatprep.subr.bf16.mxu0 0
        %784 = vmatpush1.bf16.msra.mxu0 0
        %785 = vmatprep.subr.bf16.mxu0 0
        %786 = vmatpush1.bf16.msra.mxu0 0
        %787 = vmatprep.subr.bf16.mxu0 0
        %788 = vmatpush1.bf16.msra.mxu0 0
        %789 = vmatprep.mubr.bf16.mxu0 0
        %790 = vmatmul.mubr.bf16.gmra.mrb[0].mxu0 %v748
        %v791 = vpop.f32.mrb[0].mxu0
        %v792 = vadd.f32 0.0, %v791
        %v793 = vpop.f32.mrb[0].mxu0
        %v794 = vadd.f32 0.0, %v793
        %v795 = vpop.f32.mrb[0].mxu0
        %v796 = vadd.f32 0.0, %v795
        %v797 = vpop.f32.mrb[0].mxu0
        %v798 = vadd.f32 0.0, %v797
        %799 = vdwg.mxu0
        %v802 = vunpack.c.l.b16 %v588
        %v803 = vunpack.c.l.b16 %v589
        %v804 = vpack.c.b16 %v803, %v802
        %v806 = vsel %vm746, %v804, 0
        %v809 = vsel %vm750, %v590, 0
        %v812 = vsel %vm750, %v591, 0
        %814 = vmatprep.subr.bf16.mxu0 %v812
        %815 = vmatpush1.bf16.msra.mxu0 %v809
        %816 = vmatprep.subr.bf16.mxu0 0
        %817 = vmatpush1.bf16.msra.mxu0 0
        %818 = vmatprep.subr.bf16.mxu0 0
        %819 = vmatpush1.bf16.msra.mxu0 0
        %820 = vmatprep.subr.bf16.mxu0 0
        %821 = vmatpush1.bf16.msra.mxu0 0
        %822 = vmatprep.subr.bf16.mxu0 0
        %823 = vmatpush1.bf16.msra.mxu0 0
        %824 = vmatprep.subr.bf16.mxu0 0
        %825 = vmatpush1.bf16.msra.mxu0 0
        %826 = vmatprep.subr.bf16.mxu0 0
        %827 = vmatpush1.bf16.msra.mxu0 0
        %828 = vmatprep.subr.bf16.mxu0 0
        %829 = vmatpush1.bf16.msra.mxu0 0
        %830 = vmatprep.subr.bf16.mxu0 0
        %831 = vmatpush1.bf16.msra.mxu0 0
        %832 = vmatprep.subr.bf16.mxu0 0
        %833 = vmatpush1.bf16.msra.mxu0 0
        %834 = vmatprep.subr.bf16.mxu0 0
        %835 = vmatpush1.bf16.msra.mxu0 0
        %836 = vmatprep.subr.bf16.mxu0 0
        %837 = vmatpush1.bf16.msra.mxu0 0
        %838 = vmatprep.subr.bf16.mxu0 0
        %839 = vmatpush1.bf16.msra.mxu0 0
        %840 = vmatprep.subr.bf16.mxu0 0
        %841 = vmatpush1.bf16.msra.mxu0 0
        %842 = vmatprep.subr.bf16.mxu0 0
        %843 = vmatpush1.bf16.msra.mxu0 0
        %844 = vmatprep.subr.bf16.mxu0 0
        %845 = vmatpush1.bf16.msra.mxu0 0
        %846 = vmatprep.mubr.bf16.mxu0 0
        %847 = vmatmul.mubr.bf16.gmra.mrb[0].mxu0 %v806
        %v848 = vpop.f32.mrb[0].mxu0
        %v849 = vadd.f32 %v792, %v848
        %v850 = vpop.f32.mrb[0].mxu0
        %v851 = vadd.f32 %v794, %v850
        %v852 = vpop.f32.mrb[0].mxu0
        %v853 = vadd.f32 %v796, %v852
        %v854 = vpop.f32.mrb[0].mxu0
        %v855 = vadd.f32 %v798, %v854
        %856 = vdwg.mxu0
        %857 = vrot.lane.b32.xlu0 %v734, 1
        %v858 = vpop.permute.xlu0 %857
        %859 = vrot.lane.b32.xlu0 %v735, 1
        %v860 = vpop.permute.xlu0 %859
        %v861 = vsel %vm344, %v858, %v860
        %v862 = vsel %vm344, %v860, %v858
        %v863 = vadd.f32 %v862, %v601
        %v864 = vadd.f32 %v861, %v605
        %v865 = vmax.f32 %v734, %v863
        %v866 = vmax.f32 %v735, %v864
        %867 = vrot.lane.b32.xlu0 %v734, 2
        %v868 = vpop.permute.xlu0 %867
        %869 = vrot.lane.b32.xlu0 %v735, 2
        %v870 = vpop.permute.xlu0 %869
        %v871 = vsel %vm389, %v868, %v870
        %v872 = vsel %vm389, %v870, %v868
        %v873 = vadd.f32 %v872, %v619
        %v874 = vadd.f32 %v871, %v623
        %v875 = vmax.f32 %v865, %v873
        %v876 = vmax.f32 %v866, %v874
        %877 = vrot.lane.b32.xlu0 %v734, 127
        %v878 = vpop.permute.xlu0 %877
        %879 = vrot.lane.b32.xlu0 %v735, 127
        %v880 = vpop.permute.xlu0 %879
        %v881 = vsel %vm418, %v878, %v880
        %v882 = vsel %vm418, %v880, %v878
        %v883 = vadd.f32 %v881, %v637
        %v884 = vadd.f32 %v882, %v641
        %v885 = vmax.f32 %v875, %v883
        %v886 = vmax.f32 %v876, %v884
        %887 = vrot.lane.b32.xlu0 %v734, 126
        %v888 = vpop.permute.xlu0 %887
        %889 = vrot.lane.b32.xlu0 %v735, 126
        %v890 = vpop.permute.xlu0 %889
        %v891 = vsel %vm447, %v888, %v890
        %v892 = vsel %vm447, %v890, %v888
        %v893 = vadd.f32 %v891, %v655
        %v894 = vadd.f32 %v892, %v659
        %v895 = vmax.f32 %v885, %v893
        %v896 = vmax.f32 %v886, %v894
        %897 = vrot.lane.b32.xlu0 %v895, 16
        %v898 = vpop.permute.xlu0 %897
        %899 = vrot.lane.b32.xlu0 %v896, 16
        %v900 = vpop.permute.xlu0 %899
        %v901 = vsel %vm476, %v898, %v900
        %v902 = vsel %vm476, %v900, %v898
        %v903 = vadd.f32 %v902, %v673
        %v904 = vadd.f32 %v901, %v677
        %v905 = vmax.f32 %v895, %v903
        %v906 = vmax.f32 %v896, %v904
        %907 = vrot.lane.b32.xlu0 %v895, 32
        %v908 = vpop.permute.xlu0 %907
        %909 = vrot.lane.b32.xlu0 %v896, 32
        %v910 = vpop.permute.xlu0 %909
        %v911 = vsel %vm505, %v908, %v910
        %v912 = vsel %vm505, %v910, %v908
        %v913 = vadd.f32 %v912, %v691
        %v914 = vadd.f32 %v911, %v695
        %v915 = vmax.f32 %v905, %v913
        %v916 = vmax.f32 %v906, %v914
        %917 = vrot.lane.b32.xlu0 %v895, 112
        %v918 = vpop.permute.xlu0 %917
        %919 = vrot.lane.b32.xlu0 %v896, 112
        %v920 = vpop.permute.xlu0 %919
        %v921 = vsel %vm534, %v918, %v920
        %v922 = vsel %vm534, %v920, %v918
        %v923 = vadd.f32 %v921, %v709
        %v924 = vadd.f32 %v922, %v713
        %v925 = vmax.f32 %v915, %v923
        %v926 = vmax.f32 %v916, %v924
        %927 = vrot.lane.b32.xlu0 %v895, 96
        %v928 = vpop.permute.xlu0 %927
        %929 = vrot.lane.b32.xlu0 %v896, 96
        %v930 = vpop.permute.xlu0 %929
        %v931 = vsel %vm563, %v928, %v930
        %v932 = vsel %vm563, %v930, %v928
        %v933 = vadd.f32 %v931, %v727
        %v934 = vadd.f32 %v932, %v731
        %v935 = vmax.f32 %v925, %v933
        %v936 = vmax.f32 %v926, %v934
        %s937 = scalar_lea.vmem %s4, 16
        %v938 = vld [vmem:[%s937] sm:$0xf]
        %v939 = vld [vmem:[%s937 + $0x4] sm:$0xf]
        %v940 = vpack.c.bf16 %v935, %v935
        %v941 = vpack.c.bf16 %v936, %v936
        %v944 = vunpack.c.l.b16 %v938
        %v945 = vunpack.c.l.b16 %v939
        %v946 = vpack.c.b16 %v945, %v944
        %v948 = vsel %vm746, %v946, 0
        %v951 = vsel %vm750, %v940, 0
        %v954 = vsel %vm750, %v941, 0
        %956 = vmatprep.subr.bf16.mxu0 %v954
        %957 = vmatpush1.bf16.msra.mxu0 %v951
        %958 = vmatprep.subr.bf16.mxu0 0
        %959 = vmatpush1.bf16.msra.mxu0 0
        %960 = vmatprep.subr.bf16.mxu0 0
        %961 = vmatpush1.bf16.msra.mxu0 0
        %962 = vmatprep.subr.bf16.mxu0 0
        %963 = vmatpush1.bf16.msra.mxu0 0
        %964 = vmatprep.subr.bf16.mxu0 0
        %965 = vmatpush1.bf16.msra.mxu0 0
        %966 = vmatprep.subr.bf16.mxu0 0
        %967 = vmatpush1.bf16.msra.mxu0 0
        %968 = vmatprep.subr.bf16.mxu0 0
        %969 = vmatpush1.bf16.msra.mxu0 0
        %970 = vmatprep.subr.bf16.mxu0 0
        %971 = vmatpush1.bf16.msra.mxu0 0
        %972 = vmatprep.subr.bf16.mxu0 0
        %973 = vmatpush1.bf16.msra.mxu0 0
        %974 = vmatprep.subr.bf16.mxu0 0
        %975 = vmatpush1.bf16.msra.mxu0 0
        %976 = vmatprep.subr.bf16.mxu0 0
        %977 = vmatpush1.bf16.msra.mxu0 0
        %978 = vmatprep.subr.bf16.mxu0 0
        %979 = vmatpush1.bf16.msra.mxu0 0
        %980 = vmatprep.subr.bf16.mxu0 0
        %981 = vmatpush1.bf16.msra.mxu0 0
        %982 = vmatprep.subr.bf16.mxu0 0
        %983 = vmatpush1.bf16.msra.mxu0 0
        %984 = vmatprep.subr.bf16.mxu0 0
        %985 = vmatpush1.bf16.msra.mxu0 0
        %986 = vmatprep.subr.bf16.mxu0 0
        %987 = vmatpush1.bf16.msra.mxu0 0
        %988 = vmatprep.mubr.bf16.mxu0 0
        %989 = vmatmul.mubr.bf16.gmra.mrb[0].mxu0 %v948
        %v990 = vpop.f32.mrb[0].mxu0
        %v991 = vadd.f32 0.0, %v990
        %v992 = vpop.f32.mrb[0].mxu0
        %v993 = vadd.f32 0.0, %v992
        %v994 = vpop.f32.mrb[0].mxu0
        %v995 = vadd.f32 0.0, %v994
        %v996 = vpop.f32.mrb[0].mxu0
        %v997 = vadd.f32 0.0, %v996
        %998 = vdwg.mxu0
        %v999 = vadd.f32 %v849, %v991
        %v1000 = vadd.f32 %v851, %v993
        %v1001 = vadd.f32 %v853, %v995
        %v1002 = vadd.f32 %v855, %v997
        %1003 = vrot.lane.b32.xlu0 %v935, 1
        %v1004 = vpop.permute.xlu0 %1003
        %1005 = vrot.lane.b32.xlu0 %v936, 1
        %v1006 = vpop.permute.xlu0 %1005
        %v1007 = vsel %vm344, %v1004, %v1006
        %v1008 = vsel %vm344, %v1006, %v1004
        %v1009 = vadd.f32 %v1008, %v601
        %v1010 = vadd.f32 %v1007, %v605
        %v1011 = vmax.f32 %v935, %v1009
        %v1012 = vmax.f32 %v936, %v1010
        %1013 = vrot.lane.b32.xlu0 %v935, 2
        %v1014 = vpop.permute.xlu0 %1013
        %1015 = vrot.lane.b32.xlu0 %v936, 2
        %v1016 = vpop.permute.xlu0 %1015
        %v1017 = vsel %vm389, %v1014, %v1016
        %v1018 = vsel %vm389, %v1016, %v1014
        %v1019 = vadd.f32 %v1018, %v619
        %v1020 = vadd.f32 %v1017, %v623
        %v1021 = vmax.f32 %v1011, %v1019
        %v1022 = vmax.f32 %v1012, %v1020
        %1023 = vrot.lane.b32.xlu0 %v935, 127
        %v1024 = vpop.permute.xlu0 %1023
        %1025 = vrot.lane.b32.xlu0 %v936, 127
        %v1026 = vpop.permute.xlu0 %1025
        %v1027 = vsel %vm418, %v1024, %v1026
        %v1028 = vsel %vm418, %v1026, %v1024
        %v1029 = vadd.f32 %v1027, %v637
        %v1030 = vadd.f32 %v1028, %v641
        %v1031 = vmax.f32 %v1021, %v1029
        %v1032 = vmax.f32 %v1022, %v1030
        %1033 = vrot.lane.b32.xlu0 %v935, 126
        %v1034 = vpop.permute.xlu0 %1033
        %1035 = vrot.lane.b32.xlu0 %v936, 126
        %v1036 = vpop.permute.xlu0 %1035
        %v1037 = vsel %vm447, %v1034, %v1036
        %v1038 = vsel %vm447, %v1036, %v1034
        %v1039 = vadd.f32 %v1037, %v655
        %v1040 = vadd.f32 %v1038, %v659
        %v1041 = vmax.f32 %v1031, %v1039
        %v1042 = vmax.f32 %v1032, %v1040
        %1043 = vrot.lane.b32.xlu0 %v1041, 16
        %v1044 = vpop.permute.xlu0 %1043
        %1045 = vrot.lane.b32.xlu0 %v1042, 16
        %v1046 = vpop.permute.xlu0 %1045
        %v1047 = vsel %vm476, %v1044, %v1046
        %v1048 = vsel %vm476, %v1046, %v1044
        %v1049 = vadd.f32 %v1048, %v673
        %v1050 = vadd.f32 %v1047, %v677
        %v1051 = vmax.f32 %v1041, %v1049
        %v1052 = vmax.f32 %v1042, %v1050
        %1053 = vrot.lane.b32.xlu0 %v1041, 32
        %v1054 = vpop.permute.xlu0 %1053
        %1055 = vrot.lane.b32.xlu0 %v1042, 32
        %v1056 = vpop.permute.xlu0 %1055
        %v1057 = vsel %vm505, %v1054, %v1056
        %v1058 = vsel %vm505, %v1056, %v1054
        %v1059 = vadd.f32 %v1058, %v691
        %v1060 = vadd.f32 %v1057, %v695
        %v1061 = vmax.f32 %v1051, %v1059
        %v1062 = vmax.f32 %v1052, %v1060
        %1063 = vrot.lane.b32.xlu0 %v1041, 112
        %v1064 = vpop.permute.xlu0 %1063
        %1065 = vrot.lane.b32.xlu0 %v1042, 112
        %v1066 = vpop.permute.xlu0 %1065
        %v1067 = vsel %vm534, %v1064, %v1066
        %v1068 = vsel %vm534, %v1066, %v1064
        %v1069 = vadd.f32 %v1067, %v709
        %v1070 = vadd.f32 %v1068, %v713
        %v1071 = vmax.f32 %v1061, %v1069
        %v1072 = vmax.f32 %v1062, %v1070
        %1073 = vrot.lane.b32.xlu0 %v1041, 96
        %v1074 = vpop.permute.xlu0 %1073
        %1075 = vrot.lane.b32.xlu0 %v1042, 96
        %v1076 = vpop.permute.xlu0 %1075
        %v1077 = vsel %vm563, %v1074, %v1076
        %v1078 = vsel %vm563, %v1076, %v1074
        %v1079 = vadd.f32 %v1077, %v727
        %v1080 = vadd.f32 %v1078, %v731
        %v1081 = vmax.f32 %v1071, %v1079
        %v1082 = vmax.f32 %v1072, %v1080
        %s1083 = scalar_lea.vmem %s4, 24
        %v1084 = vld [vmem:[%s1083] sm:$0xf]
        %v1085 = vld [vmem:[%s1083 + $0x4] sm:$0xf]
        %v1086 = vpack.c.bf16 %v1081, %v1081
        %v1087 = vpack.c.bf16 %v1082, %v1082
        %v1090 = vunpack.c.l.b16 %v1084
        %v1091 = vunpack.c.l.b16 %v1085
        %v1092 = vpack.c.b16 %v1091, %v1090
        %v1094 = vsel %vm746, %v1092, 0
        %v1097 = vsel %vm750, %v1086, 0
        %v1100 = vsel %vm750, %v1087, 0
        %1102 = vmatprep.subr.bf16.mxu0 %v1100
        %1103 = vmatpush1.bf16.msra.mxu0 %v1097
        %1104 = vmatprep.subr.bf16.mxu0 0
        %1105 = vmatpush1.bf16.msra.mxu0 0
        %1106 = vmatprep.subr.bf16.mxu0 0
        %1107 = vmatpush1.bf16.msra.mxu0 0
        %1108 = vmatprep.subr.bf16.mxu0 0
        %1109 = vmatpush1.bf16.msra.mxu0 0
        %1110 = vmatprep.subr.bf16.mxu0 0
        %1111 = vmatpush1.bf16.msra.mxu0 0
        %1112 = vmatprep.subr.bf16.mxu0 0
        %1113 = vmatpush1.bf16.msra.mxu0 0
        %1114 = vmatprep.subr.bf16.mxu0 0
        %1115 = vmatpush1.bf16.msra.mxu0 0
        %1116 = vmatprep.subr.bf16.mxu0 0
        %1117 = vmatpush1.bf16.msra.mxu0 0
        %1118 = vmatprep.subr.bf16.mxu0 0
        %1119 = vmatpush1.bf16.msra.mxu0 0
        %1120 = vmatprep.subr.bf16.mxu0 0
        %1121 = vmatpush1.bf16.msra.mxu0 0
        %1122 = vmatprep.subr.bf16.mxu0 0
        %1123 = vmatpush1.bf16.msra.mxu0 0
        %1124 = vmatprep.subr.bf16.mxu0 0
        %1125 = vmatpush1.bf16.msra.mxu0 0
        %1126 = vmatprep.subr.bf16.mxu0 0
        %1127 = vmatpush1.bf16.msra.mxu0 0
        %1128 = vmatprep.subr.bf16.mxu0 0
        %1129 = vmatpush1.bf16.msra.mxu0 0
        %1130 = vmatprep.subr.bf16.mxu0 0
        %1131 = vmatpush1.bf16.msra.mxu0 0
        %1132 = vmatprep.subr.bf16.mxu0 0
        %1133 = vmatpush1.bf16.msra.mxu0 0
        %1134 = vmatprep.mubr.bf16.mxu0 0
        %1135 = vmatmul.mubr.bf16.gmra.mrb[0].mxu0 %v1094
        %v1136 = vpop.f32.mrb[0].mxu0
        %v1137 = vadd.f32 0.0, %v1136
        %v1138 = vpop.f32.mrb[0].mxu0
        %v1139 = vadd.f32 0.0, %v1138
        %v1140 = vpop.f32.mrb[0].mxu0
        %v1141 = vadd.f32 0.0, %v1140
        %v1142 = vpop.f32.mrb[0].mxu0
        %v1143 = vadd.f32 0.0, %v1142
        %1144 = vdwg.mxu0
        %v1145 = vadd.f32 %v999, %v1137
        %v1146 = vadd.f32 %v1000, %v1139
        %v1147 = vadd.f32 %v1001, %v1141
        %v1148 = vadd.f32 %v1002, %v1143
        %v1149 = vld [vmem:[%s5] sm:$0xff]
        %v1150 = vld [vmem:[%s5 + $0x8] sm:$0xff]
        %1152 = vset.pattern.permute.xlu0 0
        %1153 = vperm.xlu0 %1152, %v1149
        %v1154 = vpop.permute.xlu0 %1153
        %1157 = vset.pattern.permute.xlu0 0
        %1158 = vperm.xlu0 %1157, %v1150
        %v1159 = vpop.permute.xlu0 %1158
        %v1161 = vadd.f32 %v1145, %v1154
        %v1162 = vadd.f32 %v1146, %v1154
        %v1163 = vadd.f32 %v1147, %v1159
        %v1164 = vadd.f32 %v1148, %v1159
        %v1165 = vxor.u32 %v1161, 2147483648
        %v1166 = vxor.u32 %v1162, 2147483648
        %v1167 = vxor.u32 %v1163, 2147483648
        %v1168 = vxor.u32 %v1164, 2147483648
        %v1169 = vmul.f32 %v1165, 1.442695
        %v1170 = vpow.pop %v1169
        %v1171 = vmul.f32 %v1166, 1.442695
        %v1172 = vpow.pop %v1171
        %v1173 = vmul.f32 %v1167, 1.442695
        %v1174 = vpow.pop %v1173
        %v1175 = vmul.f32 %v1168, 1.442695
        %v1176 = vpow.pop %v1175
        %v1177 = vadd.f32 %v1170, 1.0
        %v1178 = vadd.f32 %v1172, 1.0
        %v1179 = vadd.f32 %v1174, 1.0
        %v1180 = vadd.f32 %v1176, 1.0
        %v1181 = vrcp.pop %v1177
        %v1182 = vmul.f32 1.0, %v1181
        %v1183 = vrcp.pop %v1178
        %v1184 = vmul.f32 1.0, %v1183
        %v1185 = vrcp.pop %v1179
        %v1186 = vmul.f32 1.0, %v1185
        %v1187 = vrcp.pop %v1180
        %v1188 = vmul.f32 1.0, %v1187
        %v1189 = vmul.f32 %v1161, %v1182
        %v1190 = vmul.f32 %v1162, %v1184
        %v1191 = vmul.f32 %v1163, %v1186
        %v1192 = vmul.f32 %v1164, %v1188
        %1193 = vst [vmem:[%s244] sm:$0xff] %v1189
        %1194 = vst [vmem:[%s244 + $0x8] sm:$0xff] %v1190
        %1195 = vst [vmem:[%s244 + $0x10] sm:$0xff] %v1191
        %1196 = vst [vmem:[%s244 + $0x18] sm:$0xff] %v1192
        %s1197 = sand.u32 %s159, 1
        %s1198 = scalar_lea.sflag [#allocation3], %s1197
        %s1199 = sand.u32 %s159, 1
        %s1200 = smul.addr %s1199, 32
        %s1201 = scalar_lea.vmem [#allocation2], %s1200
        // Predicated region
        $region45: #{tpu_custom_call.1} parent=43 // pred_check
          %p1202 = pneg %p169
        $region46: #{tpu_custom_call.1} parent=43 // pred_check_branch
          %1204 = sbr.rel (%p1202) target = $region48
        $region47: #{tpu_custom_call.1} parent=43 // pred_region
          %s1206 = ssub.s32 512, 512
          %1207 = vsyncadd %s1198, %s1206
          %s1208 = smul.addr %s20, 4
          %s1209 = smul.addr %s1208, 128
          %s1210 = scalar_lea.hbm %s6, %s1209
          %s1211 = sshll.u32 %s1201, 4
          %s1212 = int_to_ptr.vmem [resolvable:$true] %s1211
          %1217 = dma.vmem_to_hbm [thread:$0]  %s1212, 512, %s1210, %s1198, 256, 256, 16
        $region48: #{tpu_custom_call.1} parent=43 // pred_fallthru
          _
      $region44: #{tpu_custom_call.1} parent=5 // pred_fallthru
        _
      %p1218 = scmp.le.s32.totalorder 2, %s15
      // Predicated region
      $region49: #{tpu_custom_call.1} parent=5 // pred_check
        %p1219 = pneg %p1218
      $region50: #{tpu_custom_call.1} parent=5 // pred_check_branch
        %1221 = sbr.rel (%p1219) target = $region52
      $region51: #{tpu_custom_call.1} parent=5 // pred_region
        %s1222 = ssub.s32 %s15, 2
        // Predicated region
        $region53: #{tpu_custom_call.1} parent=51 // pred_check
          %p1223 = pneg %p175
        $region54: #{tpu_custom_call.1} parent=51 // pred_check_branch
          %1225 = sbr.rel (%p1223) target = $region56
        $region55: #{tpu_custom_call.1} parent=51 // pred_region
          %s1226 = sand.u32 %s160, 1
          %s1227 = scalar_lea.sflag [#allocation3], %s1226
          %s1228 = sand.u32 %s160, 1
          %s1229 = smul.addr %s1228, 32
          %s1230 = scalar_lea.vmem [#allocation2], %s1229
          %1231 = dma.done %s1227, 512
        $region56: #{tpu_custom_call.1} parent=51 // pred_fallthru
          _
      $region52: #{tpu_custom_call.1} parent=5 // pred_fallthru
        _
    $region6: #{tpu_custom_call.1} parent=1 // loop_footer
      %s19 = sadd.s32 1, %s15
    $region7: #{tpu_custom_call.1} parent=1 // loop_footer_branch
      %14 = sbr.rel target = $region3
    $region8: #{tpu_custom_call.1} parent=1 // loop_exit
      _
    %1232 = vsyncpa [#allocation3], 1
    %s1233 = scalar_lea.sflag [#allocation3], 1
    %1234 = vsyncpa %s1233, 1

</llo_original>
